<compile_context>
chip_gen: v7x
topology: tpu7x:2x2x1
jax: 0.10.0
libtpu: 0.0.40
codegen_flags: <defaults>
</compile_context>

<pallas_src>
import functools

import jax
import jax.numpy as jnp
import numpy as np
from jax.experimental import pallas as pl
from jax.experimental.pallas import tpu as pltpu

EPS = 1e-5


def _double_conv_kernel(x_col_ref, wb1_ref, wb2_ref, bn_ref, o_ref,
                        *, N, H, W, Cout):
    M = N * H                      # rows per matmul push
    L = W * Cout                   # lane-dense output width (multiple of 128)
    inv_cnt = 1.0 / float(N * H * W)

    # Channel-selector matrices built in-kernel (one vreg each; replaces two
    # kernel inputs):
    #   sel [l, c] = 1.0 where lane l (= w*Cout + c) holds channel c   (L, Cout)
    #   selt[c, l] = sel[l, c] transposed                              (Cout, L)
    sel = (jax.lax.broadcasted_iota(jnp.int32, (L, Cout), 0) % Cout
           == jax.lax.broadcasted_iota(jnp.int32, (L, Cout), 1)
           ).astype(jnp.float32)
    selt = (jax.lax.broadcasted_iota(jnp.int32, (Cout, L), 1) % Cout
            == jax.lax.broadcasted_iota(jnp.int32, (Cout, L), 0)
            ).astype(jnp.float32)

    bn = bn_ref[...]               # (4, Cout) = [gamma1; beta1; gamma2; beta2]

    def bn_relu(y, gamma, beta):
        # Training-mode BatchNorm2d (biased batch stats over N,H,W) fused to a
        # single per-element FMA.  Per-channel reduction of the (1, L) column
        # sums goes through a tiny MXU matmul against sel (lane -> channel);
        # the per-channel scale/shift are expanded back to lanes via selt.
        col_s1 = jnp.sum(y, axis=0, keepdims=True)             # (1, L)
        col_s2 = jnp.sum(y * y, axis=0, keepdims=True)         # (1, L)
        s1 = jnp.dot(col_s1, sel, preferred_element_type=jnp.float32)  # (1, Cout)
        s2 = jnp.dot(col_s2, sel, preferred_element_type=jnp.float32)
        mean = s1 * inv_cnt
        # Single-pass variance (E[x^2] - mean^2) in f32; adequate at these
        # magnitudes — switch to a two-pass/Welford form if tolerances tighten.
        var = s2 * inv_cnt - mean * mean
        scale = gamma * jax.lax.rsqrt(var + EPS)                # (1, Cout)
        shift = beta - mean * scale
        scale_l = jnp.dot(scale, selt, preferred_element_type=jnp.float32)  # (1, L)
        shift_l = jnp.dot(shift, selt, preferred_element_type=jnp.float32)
        return jnp.maximum(y * scale_l + shift_l, 0.0)

    # ---- conv1: ONE matmul, K = 3*W*Cin (dy im2col pre-staged in wrapper) ---
    # (conv bias omitted: cancelled exactly by the batch-mean subtraction)
    y1 = jnp.dot(x_col_ref[...], wb1_ref[...],
                 preferred_element_type=jnp.float32)            # (M, L)
    h1 = bn_relu(y1, bn[0:1, :], bn[1:2, :])

    # ---- conv2 halo rows (dy = 0 / 2) ---------------------------------------
    # Row m = n*H + h.  The +-1-row shifted copies are built from one aligned
    # and one 1-row sublane slice (only ~4 vregs at this tile size) feeding a
    # single lane-aligned im2col concat; image-boundary rows are zeroed (the
    # conv's H padding).  At production row-tile sizes these halo rows should
    # arrive via an overlapping-row BlockSpec DMA instead (see TODO above).
    zrow = jnp.zeros((1, L), jnp.float32)
    h_idx = jax.lax.broadcasted_iota(jnp.int32, (M, L), 0) % H
    h1_prev = jnp.where(h_idx == 0, 0.0,
                        jnp.concatenate([zrow, h1[:M - 1, :]], axis=0))
    h1_next = jnp.where(h_idx == H - 1, 0.0,
                        jnp.concatenate([h1[1:, :], zrow], axis=0))
    h1_col = jnp.concatenate([h1_prev, h1, h1_next], axis=-1)   # (M, 3L)

    # ---- conv2: ONE matmul, K = 3*W*Cout ------------------------------------
    y2 = jnp.dot(h1_col, wb2_ref[...], preferred_element_type=jnp.float32)
    o_ref[...] = bn_relu(y2, bn[2:3, :], bn[3:4, :])


def _full_spec(shape):
    zeros = (0,) * len(shape)
    return pl.BlockSpec(shape, lambda i, _z=zeros: _z)


def _banded_weights(w_oihw, W):
    """PyTorch (Cout, Cin, 3, 3) conv weight -> (3*W*Cin, W*Cout) banded matrix.

    dy-band dy maps one H-shifted input row (W*Cin lanes, lane = w_in*Cin+ci)
    to one output row (W*Cout lanes, lane = w_out*Cout+co); the 3 dx taps and
    the width zero-padding are folded into the band (absent entries are zero),
    and the 3 dy bands are stacked along K so each conv is ONE matmul.
    """
    Cout, Cin, KH, KW = w_oihw.shape
    wt = jnp.transpose(w_oihw, (2, 3, 1, 0)).astype(jnp.float32)  # (3,3,Cin,Cout)
    bands = []
    for dy in range(KH):
        band = jnp.zeros((W, Cin, W, Cout), jnp.float32)
        for dx in range(KW):
            # output column w_out reads input column w_in = w_out + dx - 1
            diag = jnp.eye(W, W, k=1 - dx, dtype=jnp.float32)     # diag[w_in, w_out]
            band = band + diag[:, None, :, None] * wt[dy, dx][None, :, None, :]
        bands.append(band.reshape(W * Cin, W * Cout))
    return jnp.concatenate(bands, axis=0)                         # (3*W*Cin, W*Cout)


def double_conv(x_nchw, params):
    """Forward of DoubleConv. x_nchw: (N, Cin, H, W) f32 -> (N, Cout, H, W)."""
    w1, b1, g1, be1, w2, b2, g2, be2 = params
    # b1 / b2 intentionally unused: training-mode BN subtracts the batch mean,
    # which cancels a per-channel conv bias exactly (invalid for eval-mode BN).
    N, Cin, H, W = x_nchw.shape
    Cout = w1.shape[0]
    M, L = N * H, W * Cout
    K1, K2 = 3 * W * Cin, 3 * W * Cout

    # NCHW -> lane-dense (N, H, W*Cin) rows; im2col over dy staged here (HBM),
    # so the kernel does zero relayout work for conv1.
    x = jnp.transpose(x_nchw, (0, 2, 3, 1)).astype(jnp.float32).reshape(N, H, W * Cin)
    x_pad = jnp.pad(x, ((0, 0), (1, 1), (0, 0)))                  # (N, H+2, W*Cin)
    x_col = jnp.concatenate(
        [x_pad[:, 0:H], x_pad[:, 1:H + 1], x_pad[:, 2:H + 2]], axis=-1
    ).reshape(M, K1)                                              # (M, 3*W*Cin)

    wb1 = _banded_weights(w1, W)                                  # (K1, L)
    wb2 = _banded_weights(w2, W)                                  # (K2, L)
    bn = jnp.stack([g1, be1, g2, be2]).astype(jnp.float32)        # (4, Cout)

    kernel = functools.partial(_double_conv_kernel, N=N, H=H, W=W, Cout=Cout)

    # True conv FLOPs / bytes (not the band-inflated matmul FLOPs).
    flops = 2 * N * H * W * 9 * Cout * (Cin + Cout)
    bytes_accessed = 4 * (M * K1 + K1 * L + K2 * L + 4 * Cout + M * L)

    out_flat = pl.pallas_call(
        kernel,
        out_shape=jax.ShapeDtypeStruct((M, L), jnp.float32),      # lane-dense output
        grid=(1,),
        in_specs=[
            _full_spec((M, K1)),      # x_col  (im2col'd activations)
            _full_spec((K1, L)),      # banded conv1 weights
            _full_spec((K2, L)),      # banded conv2 weights
            _full_spec((4, Cout)),    # packed BN gamma/beta
        ],
        out_specs=_full_spec((M, L)),
        compiler_params=pltpu.CompilerParams(
            dimension_semantics=("arbitrary",)),
        cost_estimate=pl.CostEstimate(flops=flops, transcendentals=2 * Cout,
                                      bytes_accessed=bytes_accessed),
    )(x_col, wb1, wb2, bn)

    # (M, W*Cout) -> (N, Cout, H, W)
    return jnp.transpose(out_flat.reshape(N, H, W, Cout), (0, 3, 1, 2))


def ref_double_conv(x, params):
    """Pure-JAX reference (NCHW, training-mode BN), used as a correctness check."""
    w1, b1, g1, be1, w2, b2, g2, be2 = params

    def conv(x, w, b):
        y = jax.lax.conv_general_dilated(
            x, w, (1, 1), 'SAME',
            dimension_numbers=('NCHW', 'OIHW', 'NCHW'),
            precision=jax.lax.Precision.HIGHEST)
        return y + b[None, :, None, None]

    def bn_relu(y, g, be):
        mean = jnp.mean(y, axis=(0, 2, 3), keepdims=True)
        var = jnp.mean((y - mean) ** 2, axis=(0, 2, 3), keepdims=True)
        yn = (y - mean) * jax.lax.rsqrt(var + EPS)
        return jnp.maximum(yn * g[None, :, None, None] + be[None, :, None, None], 0.0)

    h = bn_relu(conv(x, w1, b1), g1, be1)
    return bn_relu(conv(h, w2, b2), g2, be2)


if __name__ == "__main__":
    N, Cin, Cout, H, W = 2, 4, 8, 16, 16

    key = jax.random.PRNGKey(0)
    k = jax.random.split(key, 5)
    # deterministic synthetic parameters (shapes from DoubleConv.__init__)
    w1 = jax.random.normal(k[0], (Cout, Cin, 3, 3), jnp.float32) * 0.1
    b1 = jax.random.normal(k[1], (Cout,), jnp.float32) * 0.1
    g1 = jnp.ones((Cout,), jnp.float32)      # BatchNorm2d weight init = 1
    be1 = jnp.zeros((Cout,), jnp.float32)    # BatchNorm2d bias init = 0
    w2 = jax.random.normal(k[2], (Cout, Cout, 3, 3), jnp.float32) * 0.1
    b2 = jax.random.normal(k[3], (Cout,), jnp.float32) * 0.1
    g2 = jnp.ones((Cout,), jnp.float32)
    be2 = jnp.zeros((Cout,), jnp.float32)
    params = (w1, b1, g1, be1, w2, b2, g2, be2)

    x = jax.random.normal(k[4], (N, Cin, H, W), jnp.float32)

    out = jax.block_until_ready(double_conv(x, params))
    ref = jax.block_until_ready(ref_double_conv(x, params))
    np.testing.assert_allclose(np.asarray(out), np.asarray(ref),
                               rtol=1e-3, atol=1e-3)

    print("KERNEL_OK")
</pallas_src>

<mosaic_0001>
module attributes {stable_mosaic.version = 11 : i64} {
  func.func @_double_conv_kernel(%arg0: i32, %arg1: memref<32x192xf32, #tpu.memory_space<vmem>>, %arg2: memref<192x128xf32, #tpu.memory_space<vmem>>, %arg3: memref<384x128xf32, #tpu.memory_space<vmem>>, %arg4: memref<4x8xf32, #tpu.memory_space<vmem>>, %arg5: memref<32x128xf32, #tpu.memory_space<vmem>>) attributes {dimension_semantics = [#tpu.dimension_semantics<arbitrary>], iteration_bounds = array<i64: 1>, scalar_prefetch = 0 : i64, scratch_operands = 0 : i64, tpu.core_type = #tpu.core_type<tc>, window_params = [{pipeline_mode = #tpu.pipeline_mode<synchronous>, transform_indices = @transform_0, window_bounds = array<i64: 32, 192>}, {pipeline_mode = #tpu.pipeline_mode<synchronous>, transform_indices = @transform_1, window_bounds = array<i64: 192, 128>}, {pipeline_mode = #tpu.pipeline_mode<synchronous>, transform_indices = @transform_2, window_bounds = array<i64: 384, 128>}, {pipeline_mode = #tpu.pipeline_mode<synchronous>, transform_indices = @transform_3, window_bounds = array<i64: 4, 8>}, {pipeline_mode = #tpu.pipeline_mode<synchronous>, transform_indices = @transform_4, window_bounds = array<i64: 32, 128>}]} {
    %0 = tpu.iota {dimensions = array<i32: 0>} : vector<128x8xi32>
    %c8_i32 = arith.constant 8 : i32
    %c0_i32 = arith.constant 0 : i32
    %1 = arith.cmpi eq, %c8_i32, %c0_i32 : i32
    %c1_i32 = arith.constant 1 : i32
    %2 = arith.select %1, %c1_i32, %c8_i32 : i32
    %3 = vector.broadcast %2 : i32 to vector<128x8xi32>
    %4 = arith.remsi %0, %3 : vector<128x8xi32>
    %c0_i32_0 = arith.constant 0 : i32
    %5 = vector.broadcast %c0_i32_0 : i32 to vector<128x8xi32>
    %6 = arith.cmpi ne, %4, %5 : vector<128x8xi32>
    %c0_i32_1 = arith.constant 0 : i32
    %7 = vector.broadcast %c0_i32_1 : i32 to vector<128x8xi32>
    %8 = arith.cmpi slt, %4, %7 : vector<128x8xi32>
    %c0_i32_2 = arith.constant 0 : i32
    %9 = arith.cmpi slt, %2, %c0_i32_2 : i32
    %10 = vector.broadcast %9 : i1 to vector<128x8xi1>
    %11 = vector.broadcast %10 : vector<128x8xi1> to vector<128x8xi1>
    %12 = arith.xori %8, %11 : vector<128x8xi1>
    %13 = arith.andi %12, %6 : vector<128x8xi1>
    %14 = vector.broadcast %2 : i32 to vector<128x8xi32>
    %15 = arith.addi %4, %14 : vector<128x8xi32>
    %16 = arith.select %13, %15, %4 : vector<128x8xi1>, vector<128x8xi32>
    %17 = tpu.iota {dimensions = array<i32: 1>} : vector<128x8xi32>
    %18 = arith.cmpi eq, %16, %17 : vector<128x8xi32>
    %19 = arith.extui %18 : vector<128x8xi1> to vector<128x8xi32>
    %20 = arith.sitofp %19 : vector<128x8xi32> to vector<128x8xf32>
    %21 = tpu.iota {dimensions = array<i32: 1>} : vector<8x128xi32>
    %c8_i32_3 = arith.constant 8 : i32
    %c0_i32_4 = arith.constant 0 : i32
    %22 = arith.cmpi eq, %c8_i32_3, %c0_i32_4 : i32
    %c1_i32_5 = arith.constant 1 : i32
    %23 = arith.select %22, %c1_i32_5, %c8_i32_3 : i32
    %24 = vector.broadcast %23 : i32 to vector<8x128xi32>
    %25 = arith.remsi %21, %24 : vector<8x128xi32>
    %c0_i32_6 = arith.constant 0 : i32
    %26 = vector.broadcast %c0_i32_6 : i32 to vector<8x128xi32>
    %27 = arith.cmpi ne, %25, %26 : vector<8x128xi32>
    %c0_i32_7 = arith.constant 0 : i32
    %28 = vector.broadcast %c0_i32_7 : i32 to vector<8x128xi32>
    %29 = arith.cmpi slt, %25, %28 : vector<8x128xi32>
    %c0_i32_8 = arith.constant 0 : i32
    %30 = arith.cmpi slt, %23, %c0_i32_8 : i32
    %31 = vector.broadcast %30 : i1 to vector<8x128xi1>
    %32 = vector.broadcast %31 : vector<8x128xi1> to vector<8x128xi1>
    %33 = arith.xori %29, %32 : vector<8x128xi1>
    %34 = arith.andi %33, %27 : vector<8x128xi1>
    %35 = vector.broadcast %23 : i32 to vector<8x128xi32>
    %36 = arith.addi %25, %35 : vector<8x128xi32>
    %37 = arith.select %34, %36, %25 : vector<8x128xi1>, vector<8x128xi32>
    %38 = tpu.iota {dimensions = array<i32: 0>} : vector<8x128xi32>
    %39 = arith.cmpi eq, %37, %38 : vector<8x128xi32>
    %40 = arith.extui %39 : vector<8x128xi1> to vector<8x128xi32>
    %41 = arith.sitofp %40 : vector<8x128xi32> to vector<8x128xf32>
    %c0 = arith.constant 0 : index
    %c0_9 = arith.constant 0 : index
    %42 = vector.load %arg4[%c0, %c0_9] : memref<4x8xf32, #tpu.memory_space<vmem>>, vector<4x8xf32>
    %c0_10 = arith.constant 0 : index
    %c0_11 = arith.constant 0 : index
    %43 = vector.load %arg1[%c0_10, %c0_11] : memref<32x192xf32, #tpu.memory_space<vmem>>, vector<32x192xf32>
    %c0_12 = arith.constant 0 : index
    %c0_13 = arith.constant 0 : index
    %44 = vector.load %arg2[%c0_12, %c0_13] : memref<192x128xf32, #tpu.memory_space<vmem>>, vector<192x128xf32>
    %cst = arith.constant dense<0.000000e+00> : vector<32x128xf32>
    %45 = tpu.matmul %43, %44, %cst {dimension_numbers = #tpu.dot_dimension_numbers<[1], [0], [0], [1], [0, 0, 1, 1], [], []>} : vector<32x192xf32>, vector<192x128xf32>, vector<32x128xf32> -> vector<32x128xf32>
    %46 = vector.extract_strided_slice %42 {offsets = [0, 0], sizes = [1, 8], strides = [1, 1]} : vector<4x8xf32> to vector<1x8xf32>
    %47 = vector.extract_strided_slice %42 {offsets = [1, 0], sizes = [1, 8], strides = [1, 1]} : vector<4x8xf32> to vector<1x8xf32>
    %cst_14 = arith.constant dense<0.000000e+00> : vector<128xf32>
    %48 = vector.multi_reduction <add>, %45, %cst_14 [0] : vector<32x128xf32> to vector<128xf32>
    %49 = vector.shape_cast %48 : vector<128xf32> to vector<1x128xf32>
    %50 = arith.mulf %45, %45 : vector<32x128xf32>
    %cst_15 = arith.constant dense<0.000000e+00> : vector<128xf32>
    %51 = vector.multi_reduction <add>, %50, %cst_15 [0] : vector<32x128xf32> to vector<128xf32>
    %52 = vector.shape_cast %51 : vector<128xf32> to vector<1x128xf32>
    %cst_16 = arith.constant dense<0.000000e+00> : vector<1x8xf32>
    %53 = tpu.matmul %49, %20, %cst_16 {dimension_numbers = #tpu.dot_dimension_numbers<[1], [0], [0], [1], [0, 0, 1, 1], [], []>} : vector<1x128xf32>, vector<128x8xf32>, vector<1x8xf32> -> vector<1x8xf32>
    %cst_17 = arith.constant dense<0.000000e+00> : vector<1x8xf32>
    %54 = tpu.matmul %52, %20, %cst_17 {dimension_numbers = #tpu.dot_dimension_numbers<[1], [0], [0], [1], [0, 0, 1, 1], [], []>} : vector<1x128xf32>, vector<128x8xf32>, vector<1x8xf32> -> vector<1x8xf32>
    %cst_18 = arith.constant 0.001953125 : f32
    %55 = vector.broadcast %cst_18 : f32 to vector<1x8xf32>
    %56 = arith.mulf %53, %55 : vector<1x8xf32>
    %cst_19 = arith.constant 0.001953125 : f32
    %57 = vector.broadcast %cst_19 : f32 to vector<1x8xf32>
    %58 = arith.mulf %54, %57 : vector<1x8xf32>
    %59 = arith.mulf %56, %56 : vector<1x8xf32>
    %60 = arith.subf %58, %59 : vector<1x8xf32>
    %cst_20 = arith.constant 9.99999974E-6 : f32
    %61 = vector.broadcast %cst_20 : f32 to vector<1x8xf32>
    %62 = arith.addf %60, %61 : vector<1x8xf32>
    %63 = math.rsqrt %62 : vector<1x8xf32>
    %64 = arith.mulf %46, %63 : vector<1x8xf32>
    %65 = arith.mulf %56, %64 : vector<1x8xf32>
    %66 = arith.subf %47, %65 : vector<1x8xf32>
    %cst_21 = arith.constant dense<0.000000e+00> : vector<1x128xf32>
    %67 = tpu.matmul %64, %41, %cst_21 {dimension_numbers = #tpu.dot_dimension_numbers<[1], [0], [0], [1], [0, 0, 1, 1], [], []>} : vector<1x8xf32>, vector<8x128xf32>, vector<1x128xf32> -> vector<1x128xf32>
    %cst_22 = arith.constant dense<0.000000e+00> : vector<1x128xf32>
    %68 = tpu.matmul %66, %41, %cst_22 {dimension_numbers = #tpu.dot_dimension_numbers<[1], [0], [0], [1], [0, 0, 1, 1], [], []>} : vector<1x8xf32>, vector<8x128xf32>, vector<1x128xf32> -> vector<1x128xf32>
    %69 = vector.broadcast %67 : vector<1x128xf32> to vector<32x128xf32>
    %70 = arith.mulf %45, %69 : vector<32x128xf32>
    %71 = vector.broadcast %68 : vector<1x128xf32> to vector<32x128xf32>
    %72 = arith.addf %70, %71 : vector<32x128xf32>
    %cst_23 = arith.constant 0.000000e+00 : f32
    %73 = vector.broadcast %cst_23 : f32 to vector<32x128xf32>
    %74 = arith.maximumf %72, %73 : vector<32x128xf32>
    %cst_24 = arith.constant 0.000000e+00 : f32
    %75 = vector.broadcast %cst_24 : f32 to vector<1x128xf32>
    %76 = tpu.iota {dimensions = array<i32: 0>} : vector<32x128xi32>
    %c16_i32 = arith.constant 16 : i32
    %c0_i32_25 = arith.constant 0 : i32
    %77 = arith.cmpi eq, %c16_i32, %c0_i32_25 : i32
    %c1_i32_26 = arith.constant 1 : i32
    %78 = arith.select %77, %c1_i32_26, %c16_i32 : i32
    %79 = vector.broadcast %78 : i32 to vector<32x128xi32>
    %80 = arith.remsi %76, %79 : vector<32x128xi32>
    %c0_i32_27 = arith.constant 0 : i32
    %81 = vector.broadcast %c0_i32_27 : i32 to vector<32x128xi32>
    %82 = arith.cmpi ne, %80, %81 : vector<32x128xi32>
    %c0_i32_28 = arith.constant 0 : i32
    %83 = vector.broadcast %c0_i32_28 : i32 to vector<32x128xi32>
    %84 = arith.cmpi slt, %80, %83 : vector<32x128xi32>
    %c0_i32_29 = arith.constant 0 : i32
    %85 = arith.cmpi slt, %78, %c0_i32_29 : i32
    %86 = vector.broadcast %85 : i1 to vector<32x128xi1>
    %87 = vector.broadcast %86 : vector<32x128xi1> to vector<32x128xi1>
    %88 = arith.xori %84, %87 : vector<32x128xi1>
    %89 = arith.andi %88, %82 : vector<32x128xi1>
    %90 = vector.broadcast %78 : i32 to vector<32x128xi32>
    %91 = arith.addi %80, %90 : vector<32x128xi32>
    %92 = arith.select %89, %91, %80 : vector<32x128xi1>, vector<32x128xi32>
    %c0_i32_30 = arith.constant 0 : i32
    %93 = vector.broadcast %c0_i32_30 : i32 to vector<32x128xi32>
    %94 = arith.cmpi eq, %92, %93 : vector<32x128xi32>
    %95 = vector.extract_strided_slice %74 {offsets = [0, 0], sizes = [31, 128], strides = [1, 1]} : vector<32x128xf32> to vector<31x128xf32>
    %96 = tpu.concatenate %75, %95 in 0 : vector<1x128xf32>, vector<31x128xf32> -> vector<32x128xf32>
    %cst_31 = arith.constant 0.000000e+00 : f32
    %97 = vector.broadcast %cst_31 : f32 to vector<32x128xf32>
    %98 = arith.select %94, %97, %96 : vector<32x128xi1>, vector<32x128xf32>
    %c15_i32 = arith.constant 15 : i32
    %99 = vector.broadcast %c15_i32 : i32 to vector<32x128xi32>
    %100 = arith.cmpi eq, %92, %99 : vector<32x128xi32>
    %101 = vector.extract_strided_slice %74 {offsets = [1, 0], sizes = [31, 128], strides = [1, 1]} : vector<32x128xf32> to vector<31x128xf32>
    %102 = tpu.concatenate %101, %75 in 0 : vector<31x128xf32>, vector<1x128xf32> -> vector<32x128xf32>
    %cst_32 = arith.constant 0.000000e+00 : f32
    %103 = vector.broadcast %cst_32 : f32 to vector<32x128xf32>
    %104 = arith.select %100, %103, %102 : vector<32x128xi1>, vector<32x128xf32>
    %105 = tpu.concatenate %98, %74, %104 in 1 : vector<32x128xf32>, vector<32x128xf32>, vector<32x128xf32> -> vector<32x384xf32>
    %c0_33 = arith.constant 0 : index
    %c0_34 = arith.constant 0 : index
    %106 = vector.load %arg3[%c0_33, %c0_34] : memref<384x128xf32, #tpu.memory_space<vmem>>, vector<384x128xf32>
    %cst_35 = arith.constant dense<0.000000e+00> : vector<32x128xf32>
    %107 = tpu.matmul %105, %106, %cst_35 {dimension_numbers = #tpu.dot_dimension_numbers<[1], [0], [0], [1], [0, 0, 1, 1], [], []>} : vector<32x384xf32>, vector<384x128xf32>, vector<32x128xf32> -> vector<32x128xf32>
    %108 = vector.extract_strided_slice %42 {offsets = [2, 0], sizes = [1, 8], strides = [1, 1]} : vector<4x8xf32> to vector<1x8xf32>
    %109 = vector.extract_strided_slice %42 {offsets = [3, 0], sizes = [1, 8], strides = [1, 1]} : vector<4x8xf32> to vector<1x8xf32>
    %cst_36 = arith.constant dense<0.000000e+00> : vector<128xf32>
    %110 = vector.multi_reduction <add>, %107, %cst_36 [0] : vector<32x128xf32> to vector<128xf32>
    %111 = vector.shape_cast %110 : vector<128xf32> to vector<1x128xf32>
    %112 = arith.mulf %107, %107 : vector<32x128xf32>
    %cst_37 = arith.constant dense<0.000000e+00> : vector<128xf32>
    %113 = vector.multi_reduction <add>, %112, %cst_37 [0] : vector<32x128xf32> to vector<128xf32>
    %114 = vector.shape_cast %113 : vector<128xf32> to vector<1x128xf32>
    %cst_38 = arith.constant dense<0.000000e+00> : vector<1x8xf32>
    %115 = tpu.matmul %111, %20, %cst_38 {dimension_numbers = #tpu.dot_dimension_numbers<[1], [0], [0], [1], [0, 0, 1, 1], [], []>} : vector<1x128xf32>, vector<128x8xf32>, vector<1x8xf32> -> vector<1x8xf32>
    %cst_39 = arith.constant dense<0.000000e+00> : vector<1x8xf32>
    %116 = tpu.matmul %114, %20, %cst_39 {dimension_numbers = #tpu.dot_dimension_numbers<[1], [0], [0], [1], [0, 0, 1, 1], [], []>} : vector<1x128xf32>, vector<128x8xf32>, vector<1x8xf32> -> vector<1x8xf32>
    %cst_40 = arith.constant 0.001953125 : f32
    %117 = vector.broadcast %cst_40 : f32 to vector<1x8xf32>
    %118 = arith.mulf %115, %117 : vector<1x8xf32>
    %cst_41 = arith.constant 0.001953125 : f32
    %119 = vector.broadcast %cst_41 : f32 to vector<1x8xf32>
    %120 = arith.mulf %116, %119 : vector<1x8xf32>
    %121 = arith.mulf %118, %118 : vector<1x8xf32>
    %122 = arith.subf %120, %121 : vector<1x8xf32>
    %cst_42 = arith.constant 9.99999974E-6 : f32
    %123 = vector.broadcast %cst_42 : f32 to vector<1x8xf32>
    %124 = arith.addf %122, %123 : vector<1x8xf32>
    %125 = math.rsqrt %124 : vector<1x8xf32>
    %126 = arith.mulf %108, %125 : vector<1x8xf32>
    %127 = arith.mulf %118, %126 : vector<1x8xf32>
    %128 = arith.subf %109, %127 : vector<1x8xf32>
    %cst_43 = arith.constant dense<0.000000e+00> : vector<1x128xf32>
    %129 = tpu.matmul %126, %41, %cst_43 {dimension_numbers = #tpu.dot_dimension_numbers<[1], [0], [0], [1], [0, 0, 1, 1], [], []>} : vector<1x8xf32>, vector<8x128xf32>, vector<1x128xf32> -> vector<1x128xf32>
    %cst_44 = arith.constant dense<0.000000e+00> : vector<1x128xf32>
    %130 = tpu.matmul %128, %41, %cst_44 {dimension_numbers = #tpu.dot_dimension_numbers<[1], [0], [0], [1], [0, 0, 1, 1], [], []>} : vector<1x8xf32>, vector<8x128xf32>, vector<1x128xf32> -> vector<1x128xf32>
    %131 = vector.broadcast %129 : vector<1x128xf32> to vector<32x128xf32>
    %132 = arith.mulf %107, %131 : vector<32x128xf32>
    %133 = vector.broadcast %130 : vector<1x128xf32> to vector<32x128xf32>
    %134 = arith.addf %132, %133 : vector<32x128xf32>
    %cst_45 = arith.constant 0.000000e+00 : f32
    %135 = vector.broadcast %cst_45 : f32 to vector<32x128xf32>
    %136 = arith.maximumf %134, %135 : vector<32x128xf32>
    %c0_46 = arith.constant 0 : index
    %c0_47 = arith.constant 0 : index
    %137 = vector.load %arg5[%c0_46, %c0_47] : memref<32x128xf32, #tpu.memory_space<vmem>>, vector<32x128xf32>
    tpu.vector_store %arg5[%c0_46, %c0_47], %136 {strides = array<i32>} : memref<32x128xf32, #tpu.memory_space<vmem>>, vector<32x128xf32>,
    return
  }
  func.func @transform_0(%arg0: i32) -> (i32, i32) {
    %c0_i32 = arith.constant 0 : i32
    %c0_i32_0 = arith.constant 0 : i32
    %c0_i32_1 = arith.constant 0 : i32
    return %c0_i32, %c0_i32_0 : i32, i32
  }
  func.func @transform_1(%arg0: i32) -> (i32, i32) {
    %c0_i32 = arith.constant 0 : i32
    %c0_i32_0 = arith.constant 0 : i32
    %c0_i32_1 = arith.constant 0 : i32
    return %c0_i32, %c0_i32_0 : i32, i32
  }
  func.func @transform_2(%arg0: i32) -> (i32, i32) {
    %c0_i32 = arith.constant 0 : i32
    %c0_i32_0 = arith.constant 0 : i32
    %c0_i32_1 = arith.constant 0 : i32
    return %c0_i32, %c0_i32_0 : i32, i32
  }
  func.func @transform_3(%arg0: i32) -> (i32, i32) {
    %c0_i32 = arith.constant 0 : i32
    %c0_i32_0 = arith.constant 0 : i32
    %c0_i32_1 = arith.constant 0 : i32
    return %c0_i32, %c0_i32_0 : i32, i32
  }
  func.func @transform_4(%arg0: i32) -> (i32, i32) {
    %c0_i32 = arith.constant 0 : i32
    %c0_i32_0 = arith.constant 0 : i32
    %c0_i32_1 = arith.constant 0 : i32
    return %c0_i32, %c0_i32_0 : i32, i32
  }
}

</mosaic_0001>

<llo_original>
// kernel: tpu_custom_call.1
$region0: #{tpu_custom_call.1}
  #allocation0 [shape = 'u32[]', space=smem, size = 0x4, offset = 0x4, fixed_abs, tag = 'smem constant byte address 0x4 - core index']
  #allocation1 [shape = 'u32[144,128]{1,0:T(1,128)}', space=vmem, size = 0x12000, scoped, tag = 'internal scratch']
  %s0 = inlined_call_operand.hbm [shape: f32[32,192], index: 0, kind: input, shape index: {}]
  %s1 = inlined_call_operand.hbm [shape: f32[192,128], index: 1, kind: input, shape index: {}]
  %s2 = inlined_call_operand.hbm [shape: f32[384,128], index: 2, kind: input, shape index: {}]
  %s3 = inlined_call_operand.vmem [shape: f32[4,8], index: 3, kind: input, shape index: {}]
  %s4 = inlined_call_operand.hbm [shape: f32[32,128], index: 4, kind: output, shape index: {}]
  %s5 = sld [smem:[#allocation0]]
  $region38: #{tpu_custom_call.1} parent=0
    _
  %s7 = ssub.s32 1, %s5
  %s8 = scalar_select 0, %s7, %s5
  $region1: #{tpu_custom_call.1} parent=0
    #allocation2 [shape = 'u8[32768]{0}', space=vmem, size = 0x8000, scoped, tag = 'input window, operand 0, single buffered']
    #allocation3 [shape = 's32[1]{0}', space=sflag, size = 0x4, scoped, tag = 'scoped memory for tpu_custom_call.1']
    #allocation4 [shape = 's32[1]{0}', space=sflag, size = 0x4, scoped, tag = 'scoped memory for tpu_custom_call.1']
    #allocation5 [shape = 'u8[98304]{0}', space=vmem, size = 0x18000, scoped, tag = 'input window, operand 1, single buffered']
    #allocation6 [shape = 's32[1]{0}', space=sflag, size = 0x4, scoped, tag = 'scoped memory for tpu_custom_call.1']
    #allocation7 [shape = 'u8[196608]{0}', space=vmem, size = 0x30000, scoped, tag = 'input window, operand 2, single buffered']
    #allocation8 [shape = 'u8[16384]{0}', space=vmem, size = 0x4000, scoped, tag = 'output window, operand 0, single buffered']
    %9 = vsyncpa [#allocation3], 0
    %10 = vsyncpa [#allocation6], 0
    %11 = vsyncpa [#allocation4], 0
    // Predicated region
    $region2: #{tpu_custom_call.1} parent=1 // pred_check
      _
    $region3: #{tpu_custom_call.1} parent=1 // pred_check_branch
      %13 = sbr.rel (0) target = $region5
    $region4: #{tpu_custom_call.1} parent=1 // pred_region
      %s15 = ssub.s32 1024, 1024
      %16 = vsyncadd [#allocation3], %s15
      %s17 = sshll.u32 [#allocation2], 4
      %s18 = int_to_ptr.vmem [resolvable:$true] %s17
      %23 = dma.hbm_to_vmem [thread:$0]  %s0, 1024, %s18, [#allocation3], 256, 256, 16
    $region5: #{tpu_custom_call.1} parent=1 // pred_fallthru
      _
    // Predicated region
    $region6: #{tpu_custom_call.1} parent=1 // pred_check
      _
    $region7: #{tpu_custom_call.1} parent=1 // pred_check_branch
      %25 = sbr.rel (0) target = $region9
    $region8: #{tpu_custom_call.1} parent=1 // pred_region
      %s27 = ssub.s32 3072, 3072
      %28 = vsyncadd [#allocation6], %s27
      %s29 = sshll.u32 [#allocation5], 4
      %s30 = int_to_ptr.vmem [resolvable:$true] %s29
      %35 = dma.hbm_to_vmem [thread:$0]  %s1, 3072, %s30, [#allocation6], 128, 128, 8
    $region9: #{tpu_custom_call.1} parent=1 // pred_fallthru
      _
    // Predicated region
    $region10: #{tpu_custom_call.1} parent=1 // pred_check
      _
    $region11: #{tpu_custom_call.1} parent=1 // pred_check_branch
      %37 = sbr.rel (0) target = $region13
    $region12: #{tpu_custom_call.1} parent=1 // pred_region
      %s39 = ssub.s32 6144, 6144
      %40 = vsyncadd [#allocation6], %s39
      %s41 = sshll.u32 [#allocation7], 4
      %s42 = int_to_ptr.vmem [resolvable:$true] %s41
      %47 = dma.hbm_to_vmem [thread:$0]  %s2, 6144, %s42, [#allocation6], 128, 128, 8
    $region13: #{tpu_custom_call.1} parent=1 // pred_fallthru
      _
    // Predicated region
    $region14: #{tpu_custom_call.1} parent=1 // pred_check
      _
    $region15: #{tpu_custom_call.1} parent=1 // pred_check_branch
      %49 = sbr.rel (0) target = $region17
    $region16: #{tpu_custom_call.1} parent=1 // pred_region
      _
    $region17: #{tpu_custom_call.1} parent=1 // pred_fallthru
      _
    // Predicated region
    $region18: #{tpu_custom_call.1} parent=1 // pred_check
      _
    $region19: #{tpu_custom_call.1} parent=1 // pred_check_branch
      %51 = sbr.rel (0) target = $region21
    $region20: #{tpu_custom_call.1} parent=1 // pred_region
      %52 = dma.done [#allocation3], 1024
    $region21: #{tpu_custom_call.1} parent=1 // pred_fallthru
      _
    // Predicated region
    $region22: #{tpu_custom_call.1} parent=1 // pred_check
      _
    $region23: #{tpu_custom_call.1} parent=1 // pred_check_branch
      %54 = sbr.rel (0) target = $region25
    $region24: #{tpu_custom_call.1} parent=1 // pred_region
      %55 = dma.done [#allocation6], 3072
    $region25: #{tpu_custom_call.1} parent=1 // pred_fallthru
      _
    // Predicated region
    $region26: #{tpu_custom_call.1} parent=1 // pred_check
      _
    $region27: #{tpu_custom_call.1} parent=1 // pred_check_branch
      %57 = sbr.rel (0) target = $region29
    $region28: #{tpu_custom_call.1} parent=1 // pred_region
      %58 = dma.done [#allocation6], 6144
    $region29: #{tpu_custom_call.1} parent=1 // pred_fallthru
      _
    %v59 = vlaneseq
    %v60 = vshrl.u32 %v59, 7
    %v61 = vadd.s32 %v60, 8
    %v62 = vadd.s32 %v60, 16
    %v63 = vadd.s32 %v60, 24
    %v64 = vadd.s32 %v60, 32
    %v65 = vadd.s32 %v60, 40
    %v66 = vadd.s32 %v60, 48
    %v67 = vadd.s32 %v60, 56
    %v68 = vadd.s32 %v60, 64
    %v69 = vadd.s32 %v60, 72
    %v70 = vadd.s32 %v60, 80
    %v71 = vadd.s32 %v60, 88
    %v72 = vadd.s32 %v60, 96
    %v73 = vadd.s32 %v60, 104
    %v74 = vadd.s32 %v60, 112
    %v75 = vadd.s32 %v60, 120
    %vm76 = vcmp.lt.s32.totalorder %v60, 0
    %v77 = vsub.s32 0, %v60
    %v78 = vsel %vm76, %v77, %v60
    %v79 = vshrl.u32 %v78, 3
    %v80 = vand.u32 %v78, 7
    %v81 = vsub.s32 0, %v80
    %v82 = vsel %vm76, %v81, %v80
    %vm83 = vcmp.lt.s32.totalorder %v61, 0
    %v84 = vsub.s32 0, %v61
    %v85 = vsel %vm83, %v84, %v61
    %v86 = vshrl.u32 %v85, 3
    %v87 = vand.u32 %v85, 7
    %v88 = vsub.s32 0, %v87
    %v89 = vsel %vm83, %v88, %v87
    %vm90 = vcmp.lt.s32.totalorder %v62, 0
    %v91 = vsub.s32 0, %v62
    %v92 = vsel %vm90, %v91, %v62
    %v93 = vshrl.u32 %v92, 3
    %v94 = vand.u32 %v92, 7
    %v95 = vsub.s32 0, %v94
    %v96 = vsel %vm90, %v95, %v94
    %vm97 = vcmp.lt.s32.totalorder %v63, 0
    %v98 = vsub.s32 0, %v63
    %v99 = vsel %vm97, %v98, %v63
    %v100 = vshrl.u32 %v99, 3
    %v101 = vand.u32 %v99, 7
    %v102 = vsub.s32 0, %v101
    %v103 = vsel %vm97, %v102, %v101
    %vm104 = vcmp.lt.s32.totalorder %v64, 0
    %v105 = vsub.s32 0, %v64
    %v106 = vsel %vm104, %v105, %v64
    %v107 = vshrl.u32 %v106, 3
    %v108 = vand.u32 %v106, 7
    %v109 = vsub.s32 0, %v108
    %v110 = vsel %vm104, %v109, %v108
    %vm111 = vcmp.lt.s32.totalorder %v65, 0
    %v112 = vsub.s32 0, %v65
    %v113 = vsel %vm111, %v112, %v65
    %v114 = vshrl.u32 %v113, 3
    %v115 = vand.u32 %v113, 7
    %v116 = vsub.s32 0, %v115
    %v117 = vsel %vm111, %v116, %v115
    %vm118 = vcmp.lt.s32.totalorder %v66, 0
    %v119 = vsub.s32 0, %v66
    %v120 = vsel %vm118, %v119, %v66
    %v121 = vshrl.u32 %v120, 3
    %v122 = vand.u32 %v120, 7
    %v123 = vsub.s32 0, %v122
    %v124 = vsel %vm118, %v123, %v122
    %vm125 = vcmp.lt.s32.totalorder %v67, 0
    %v126 = vsub.s32 0, %v67
    %v127 = vsel %vm125, %v126, %v67
    %v128 = vshrl.u32 %v127, 3
    %v129 = vand.u32 %v127, 7
    %v130 = vsub.s32 0, %v129
    %v131 = vsel %vm125, %v130, %v129
    %vm132 = vcmp.lt.s32.totalorder %v68, 0
    %v133 = vsub.s32 0, %v68
    %v134 = vsel %vm132, %v133, %v68
    %v135 = vshrl.u32 %v134, 3
    %v136 = vand.u32 %v134, 7
    %v137 = vsub.s32 0, %v136
    %v138 = vsel %vm132, %v137, %v136
    %vm139 = vcmp.lt.s32.totalorder %v69, 0
    %v140 = vsub.s32 0, %v69
    %v141 = vsel %vm139, %v140, %v69
    %v142 = vshrl.u32 %v141, 3
    %v143 = vand.u32 %v141, 7
    %v144 = vsub.s32 0, %v143
    %v145 = vsel %vm139, %v144, %v143
    %vm146 = vcmp.lt.s32.totalorder %v70, 0
    %v147 = vsub.s32 0, %v70
    %v148 = vsel %vm146, %v147, %v70
    %v149 = vshrl.u32 %v148, 3
    %v150 = vand.u32 %v148, 7
    %v151 = vsub.s32 0, %v150
    %v152 = vsel %vm146, %v151, %v150
    %vm153 = vcmp.lt.s32.totalorder %v71, 0
    %v154 = vsub.s32 0, %v71
    %v155 = vsel %vm153, %v154, %v71
    %v156 = vshrl.u32 %v155, 3
    %v157 = vand.u32 %v155, 7
    %v158 = vsub.s32 0, %v157
    %v159 = vsel %vm153, %v158, %v157
    %vm160 = vcmp.lt.s32.totalorder %v72, 0
    %v161 = vsub.s32 0, %v72
    %v162 = vsel %vm160, %v161, %v72
    %v163 = vshrl.u32 %v162, 3
    %v164 = vand.u32 %v162, 7
    %v165 = vsub.s32 0, %v164
    %v166 = vsel %vm160, %v165, %v164
    %vm167 = vcmp.lt.s32.totalorder %v73, 0
    %v168 = vsub.s32 0, %v73
    %v169 = vsel %vm167, %v168, %v73
    %v170 = vshrl.u32 %v169, 3
    %v171 = vand.u32 %v169, 7
    %v172 = vsub.s32 0, %v171
    %v173 = vsel %vm167, %v172, %v171
    %vm174 = vcmp.lt.s32.totalorder %v74, 0
    %v175 = vsub.s32 0, %v74
    %v176 = vsel %vm174, %v175, %v74
    %v177 = vshrl.u32 %v176, 3
    %v178 = vand.u32 %v176, 7
    %v179 = vsub.s32 0, %v178
    %v180 = vsel %vm174, %v179, %v178
    %vm181 = vcmp.lt.s32.totalorder %v75, 0
    %v182 = vsub.s32 0, %v75
    %v183 = vsel %vm181, %v182, %v75
    %v184 = vshrl.u32 %v183, 3
    %v185 = vand.u32 %v183, 7
    %v186 = vsub.s32 0, %v185
    %v187 = vsel %vm181, %v186, %v185
    %vm188 = vcmp.ne.s32.totalorder %v82, 0
    %vm189 = vcmp.ne.s32.totalorder %v89, 0
    %vm190 = vcmp.ne.s32.totalorder %v96, 0
    %vm191 = vcmp.ne.s32.totalorder %v103, 0
    %vm192 = vcmp.ne.s32.totalorder %v110, 0
    %vm193 = vcmp.ne.s32.totalorder %v117, 0
    %vm194 = vcmp.ne.s32.totalorder %v124, 0
    %vm195 = vcmp.ne.s32.totalorder %v131, 0
    %vm196 = vcmp.ne.s32.totalorder %v138, 0
    %vm197 = vcmp.ne.s32.totalorder %v145, 0
    %vm198 = vcmp.ne.s32.totalorder %v152, 0
    %vm199 = vcmp.ne.s32.totalorder %v159, 0
    %vm200 = vcmp.ne.s32.totalorder %v166, 0
    %vm201 = vcmp.ne.s32.totalorder %v173, 0
    %vm202 = vcmp.ne.s32.totalorder %v180, 0
    %vm203 = vcmp.ne.s32.totalorder %v187, 0
    %vm204 = vcmp.lt.s32.totalorder %v82, 0
    %vm205 = vcmp.lt.s32.totalorder %v89, 0
    %vm206 = vcmp.lt.s32.totalorder %v96, 0
    %vm207 = vcmp.lt.s32.totalorder %v103, 0
    %vm208 = vcmp.lt.s32.totalorder %v110, 0
    %vm209 = vcmp.lt.s32.totalorder %v117, 0
    %vm210 = vcmp.lt.s32.totalorder %v124, 0
    %vm211 = vcmp.lt.s32.totalorder %v131, 0
    %vm212 = vcmp.lt.s32.totalorder %v138, 0
    %vm213 = vcmp.lt.s32.totalorder %v145, 0
    %vm214 = vcmp.lt.s32.totalorder %v152, 0
    %vm215 = vcmp.lt.s32.totalorder %v159, 0
    %vm216 = vcmp.lt.s32.totalorder %v166, 0
    %vm217 = vcmp.lt.s32.totalorder %v173, 0
    %vm218 = vcmp.lt.s32.totalorder %v180, 0
    %vm219 = vcmp.lt.s32.totalorder %v187, 0
    %vm220 = vmand %vm204, %vm188
    %vm221 = vmand %vm205, %vm189
    %vm222 = vmand %vm206, %vm190
    %vm223 = vmand %vm207, %vm191
    %vm224 = vmand %vm208, %vm192
    %vm225 = vmand %vm209, %vm193
    %vm226 = vmand %vm210, %vm194
    %vm227 = vmand %vm211, %vm195
    %vm228 = vmand %vm212, %vm196
    %vm229 = vmand %vm213, %vm197
    %vm230 = vmand %vm214, %vm198
    %vm231 = vmand %vm215, %vm199
    %vm232 = vmand %vm216, %vm200
    %vm233 = vmand %vm217, %vm201
    %vm234 = vmand %vm218, %vm202
    %vm235 = vmand %vm219, %vm203
    %v236 = vadd.s32 %v82, 8
    %v237 = vadd.s32 %v89, 8
    %v238 = vadd.s32 %v96, 8
    %v239 = vadd.s32 %v103, 8
    %v240 = vadd.s32 %v110, 8
    %v241 = vadd.s32 %v117, 8
    %v242 = vadd.s32 %v124, 8
    %v243 = vadd.s32 %v131, 8
    %v244 = vadd.s32 %v138, 8
    %v245 = vadd.s32 %v145, 8
    %v246 = vadd.s32 %v152, 8
    %v247 = vadd.s32 %v159, 8
    %v248 = vadd.s32 %v166, 8
    %v249 = vadd.s32 %v173, 8
    %v250 = vadd.s32 %v180, 8
    %v251 = vadd.s32 %v187, 8
    %v252 = vsel %vm220, %v236, %v82
    %v253 = vsel %vm221, %v237, %v89
    %v254 = vsel %vm222, %v238, %v96
    %v255 = vsel %vm223, %v239, %v103
    %v256 = vsel %vm224, %v240, %v110
    %v257 = vsel %vm225, %v241, %v117
    %v258 = vsel %vm226, %v242, %v124
    %v259 = vsel %vm227, %v243, %v131
    %v260 = vsel %vm228, %v244, %v138
    %v261 = vsel %vm229, %v245, %v145
    %v262 = vsel %vm230, %v246, %v152
    %v263 = vsel %vm231, %v247, %v159
    %v264 = vsel %vm232, %v248, %v166
    %v265 = vsel %vm233, %v249, %v173
    %v266 = vsel %vm234, %v250, %v180
    %v267 = vsel %vm235, %v251, %v187
    %v268 = vlaneseq
    %v269 = vand.u32 %v268, 127
    %vm270 = vcmp.eq.s32.totalorder %v252, %v269
    %vm271 = vcmp.eq.s32.totalorder %v253, %v269
    %vm272 = vcmp.eq.s32.totalorder %v254, %v269
    %vm273 = vcmp.eq.s32.totalorder %v255, %v269
    %vm274 = vcmp.eq.s32.totalorder %v256, %v269
    %vm275 = vcmp.eq.s32.totalorder %v257, %v269
    %vm276 = vcmp.eq.s32.totalorder %v258, %v269
    %vm277 = vcmp.eq.s32.totalorder %v259, %v269
    %vm278 = vcmp.eq.s32.totalorder %v260, %v269
    %vm279 = vcmp.eq.s32.totalorder %v261, %v269
    %vm280 = vcmp.eq.s32.totalorder %v262, %v269
    %vm281 = vcmp.eq.s32.totalorder %v263, %v269
    %vm282 = vcmp.eq.s32.totalorder %v264, %v269
    %vm283 = vcmp.eq.s32.totalorder %v265, %v269
    %vm284 = vcmp.eq.s32.totalorder %v266, %v269
    %vm285 = vcmp.eq.s32.totalorder %v267, %v269
    %v286 = vsel %vm270, 1, 0
    %v287 = vsel %vm271, 1, 0
    %v288 = vsel %vm272, 1, 0
    %v289 = vsel %vm273, 1, 0
    %v290 = vsel %vm274, 1, 0
    %v291 = vsel %vm275, 1, 0
    %v292 = vsel %vm276, 1, 0
    %v293 = vsel %vm277, 1, 0
    %v294 = vsel %vm278, 1, 0
    %v295 = vsel %vm279, 1, 0
    %v296 = vsel %vm280, 1, 0
    %v297 = vsel %vm281, 1, 0
    %v298 = vsel %vm282, 1, 0
    %v299 = vsel %vm283, 1, 0
    %v300 = vsel %vm284, 1, 0
    %v301 = vsel %vm285, 1, 0
    %v302 = vcvt.s32.f32 %v286
    %v303 = vcvt.s32.f32 %v287
    %v304 = vcvt.s32.f32 %v288
    %v305 = vcvt.s32.f32 %v289
    %v306 = vcvt.s32.f32 %v290
    %v307 = vcvt.s32.f32 %v291
    %v308 = vcvt.s32.f32 %v292
    %v309 = vcvt.s32.f32 %v293
    %v310 = vcvt.s32.f32 %v294
    %v311 = vcvt.s32.f32 %v295
    %v312 = vcvt.s32.f32 %v296
    %v313 = vcvt.s32.f32 %v297
    %v314 = vcvt.s32.f32 %v298
    %v315 = vcvt.s32.f32 %v299
    %v316 = vcvt.s32.f32 %v300
    %v317 = vcvt.s32.f32 %v301
    %vm318 = vcmp.lt.s32.totalorder %v269, 0
    %v319 = vsub.s32 0, %v269
    %v320 = vsel %vm318, %v319, %v269
    %v321 = vshrl.u32 %v320, 3
    %v322 = vand.u32 %v320, 7
    %v323 = vsub.s32 0, %v322
    %v324 = vsel %vm318, %v323, %v322
    %vm325 = vcmp.ne.s32.totalorder %v324, 0
    %vm326 = vcmp.lt.s32.totalorder %v324, 0
    %vm327 = vmand %vm326, %vm325
    %v328 = vadd.s32 %v324, 8
    %v329 = vsel %vm327, %v328, %v324
    %vm330 = vcmp.eq.s32.totalorder %v329, %v60
    %v331 = vsel %vm330, 1, 0
    %v332 = vcvt.s32.f32 %v331
    %v333 = vld [vmem:[%s3] sm:$0xf]
    %v334 = vld [vmem:[#allocation2] sm:$0xff]
    %v335 = vld [vmem:[#allocation2 + $0x8] sm:$0xff]
    %v336 = vld [vmem:[#allocation2 + $0x10] sm:$0xff]
    %v337 = vld [vmem:[#allocation2 + $0x18] sm:$0xff]
    %v338 = vld [vmem:[#allocation2 + $0x20] sm:$0xff]
    %v339 = vld [vmem:[#allocation2 + $0x28] sm:$0xff]
    %v340 = vld [vmem:[#allocation2 + $0x30] sm:$0xff]
    %v341 = vld [vmem:[#allocation2 + $0x38] sm:$0xff]
    %v342 = vld [vmem:[#allocation5] sm:$0xff]
    %v343 = vld [vmem:[#allocation5 + $0x8] sm:$0xff]
    %v344 = vld [vmem:[#allocation5 + $0x10] sm:$0xff]
    %v345 = vld [vmem:[#allocation5 + $0x18] sm:$0xff]
    %v346 = vld [vmem:[#allocation5 + $0x20] sm:$0xff]
    %v347 = vld [vmem:[#allocation5 + $0x28] sm:$0xff]
    %v348 = vld [vmem:[#allocation5 + $0x30] sm:$0xff]
    %v349 = vld [vmem:[#allocation5 + $0x38] sm:$0xff]
    %v350 = vld [vmem:[#allocation5 + $0x40] sm:$0xff]
    %v351 = vld [vmem:[#allocation5 + $0x48] sm:$0xff]
    %v352 = vld [vmem:[#allocation5 + $0x50] sm:$0xff]
    %v353 = vld [vmem:[#allocation5 + $0x58] sm:$0xff]
    %v354 = vld [vmem:[#allocation5 + $0x60] sm:$0xff]
    %v355 = vld [vmem:[#allocation5 + $0x68] sm:$0xff]
    %v356 = vld [vmem:[#allocation5 + $0x70] sm:$0xff]
    %v357 = vld [vmem:[#allocation5 + $0x78] sm:$0xff]
    %v358 = vld [vmem:[#allocation5 + $0x80] sm:$0xff]
    %v359 = vld [vmem:[#allocation5 + $0x88] sm:$0xff]
    %v360 = vld [vmem:[#allocation5 + $0x90] sm:$0xff]
    %v361 = vld [vmem:[#allocation5 + $0x98] sm:$0xff]
    %v362 = vld [vmem:[#allocation5 + $0xa0] sm:$0xff]
    %v363 = vld [vmem:[#allocation5 + $0xa8] sm:$0xff]
    %v364 = vld [vmem:[#allocation5 + $0xb0] sm:$0xff]
    %v365 = vld [vmem:[#allocation5 + $0xb8] sm:$0xff]
    %vm366 = vcmask 523264
    %v368 = vsel %vm366, %v335, 0
    %v371 = vsel %vm366, %v337, 0
    %v374 = vsel %vm366, %v339, 0
    %v377 = vsel %vm366, %v341, 0
    %379 = vmatprep.subr.mxu0 0.0
    %380 = vmatpush1.msra.mxu0 %v342
    %381 = vmatprep.subr.mxu0 0.0
    %382 = vmatpush1.msra.mxu0 %v343
    %383 = vmatprep.subr.mxu0 0.0
    %384 = vmatpush1.msra.mxu0 %v344
    %385 = vmatprep.subr.mxu0 0.0
    %386 = vmatpush1.msra.mxu0 %v345
    %387 = vmatprep.subr.mxu0 0.0
    %388 = vmatpush1.msra.mxu0 %v346
    %389 = vmatprep.subr.mxu0 0.0
    %390 = vmatpush1.msra.mxu0 %v347
    %391 = vmatprep.subr.mxu0 0.0
    %392 = vmatpush1.msra.mxu0 %v348
    %393 = vmatprep.subr.mxu0 0.0
    %394 = vmatpush1.msra.mxu0 %v349
    %395 = vmatprep.subr.mxu0 0.0
    %396 = vmatpush1.msra.mxu0 %v350
    %397 = vmatprep.subr.mxu0 0.0
    %398 = vmatpush1.msra.mxu0 %v351
    %399 = vmatprep.subr.mxu0 0.0
    %400 = vmatpush1.msra.mxu0 %v352
    %401 = vmatprep.subr.mxu0 0.0
    %402 = vmatpush1.msra.mxu0 %v353
    %403 = vmatprep.subr.mxu0 0.0
    %404 = vmatpush1.msra.mxu0 %v354
    %405 = vmatprep.subr.mxu0 0.0
    %406 = vmatpush1.msra.mxu0 %v355
    %407 = vmatprep.subr.mxu0 0.0
    %408 = vmatpush1.msra.mxu0 %v356
    %409 = vmatprep.subr.mxu0 0.0
    %410 = vmatpush1.msra.mxu0 %v357
    %411 = vmatprep.subr.mxu0 0.0
    %412 = vmatpush1.msra.mxu0 %v358
    %413 = vmatprep.subr.mxu0 0.0
    %414 = vmatpush1.msra.mxu0 %v359
    %415 = vmatprep.subr.mxu0 0.0
    %416 = vmatpush1.msra.mxu0 %v360
    %417 = vmatprep.subr.mxu0 0.0
    %418 = vmatpush1.msra.mxu0 %v361
    %419 = vmatprep.subr.mxu0 0.0
    %420 = vmatpush1.msra.mxu0 %v362
    %421 = vmatprep.subr.mxu0 0.0
    %422 = vmatpush1.msra.mxu0 %v363
    %423 = vmatprep.subr.mxu0 0.0
    %424 = vmatpush1.msra.mxu0 %v364
    %425 = vmatprep.subr.mxu0 0.0
    %426 = vmatpush1.msra.mxu0 %v365
    %427 = vmatprep.subr.mxu0 0.0
    %428 = vmatpush1.msra.mxu0 0.0
    %429 = vmatprep.subr.mxu0 0.0
    %430 = vmatpush1.msra.mxu0 0.0
    %431 = vmatprep.subr.mxu0 0.0
    %432 = vmatpush1.msra.mxu0 0.0
    %433 = vmatprep.subr.mxu0 0.0
    %434 = vmatpush1.msra.mxu0 0.0
    %435 = vmatprep.subr.mxu0 0.0
    %436 = vmatpush1.msra.mxu0 0.0
    %437 = vmatprep.subr.mxu0 0.0
    %438 = vmatpush1.msra.mxu0 0.0
    %439 = vmatprep.subr.mxu0 0.0
    %440 = vmatpush1.msra.mxu0 0.0
    %441 = vmatprep.subr.mxu0 0.0
    %442 = vmatpush1.msra.mxu0 0.0
    %443 = vmatprep.mubr.f32.mxu0 %v368
    %444 = vmatmul.mubr.f32.gmra.mrb[0].mxu0 %v334
    %v445 = vpop.f32.mrb[0].mxu0
    %v446 = vadd.f32 0.0, %v445
    %v447 = vpop.f32.mrb[0].mxu0
    %448 = vmatprep.mubr.f32.mxu0 %v371
    %449 = vmatmul.mubr.f32.gmra.mrb[0].mxu0 %v336
    %v450 = vpop.f32.mrb[0].mxu0
    %v451 = vadd.f32 0.0, %v450
    %v452 = vpop.f32.mrb[0].mxu0
    %453 = vmatprep.mubr.f32.mxu0 %v374
    %454 = vmatmul.mubr.f32.gmra.mrb[0].mxu0 %v338
    %v455 = vpop.f32.mrb[0].mxu0
    %v456 = vadd.f32 0.0, %v455
    %v457 = vpop.f32.mrb[0].mxu0
    %458 = vmatprep.mubr.f32.mxu0 %v377
    %459 = vmatmul.mubr.f32.gmra.mrb[0].mxu0 %v340
    %v460 = vpop.f32.mrb[0].mxu0
    %v461 = vadd.f32 0.0, %v460
    %v462 = vpop.f32.mrb[0].mxu0
    %463 = vdwg.mxu0
    %v464 = vadd.f32 %v446, %v451
    %v465 = vadd.f32 %v464, %v456
    %v466 = vadd.f32 %v465, %v461
    %v467 = vrot.slane %v466, 4
    %v468 = vadd.f32 %v466, %v467
    %v469 = vrot.slane %v468, 2
    %v470 = vadd.f32 %v468, %v469
    %v471 = vrot.slane %v470, 1
    %v472 = vadd.f32 %v470, %v471
    %v473 = vmul.f32 %v446, %v446
    %v474 = vmul.f32 %v451, %v451
    %v475 = vmul.f32 %v456, %v456
    %v476 = vmul.f32 %v461, %v461
    %v477 = vadd.f32 %v473, %v474
    %v478 = vadd.f32 %v477, %v475
    %v479 = vadd.f32 %v478, %v476
    %v480 = vrot.slane %v479, 4
    %v481 = vadd.f32 %v479, %v480
    %v482 = vrot.slane %v481, 2
    %v483 = vadd.f32 %v481, %v482
    %v484 = vrot.slane %v483, 1
    %v485 = vadd.f32 %v483, %v484
    %486 = vmatprep.subr.mxu0 0.0
    %487 = vmatpush1.msra.mxu0 %v302
    %488 = vmatprep.subr.mxu0 0.0
    %489 = vmatpush1.msra.mxu0 %v303
    %490 = vmatprep.subr.mxu0 0.0
    %491 = vmatpush1.msra.mxu0 %v304
    %492 = vmatprep.subr.mxu0 0.0
    %493 = vmatpush1.msra.mxu0 %v305
    %494 = vmatprep.subr.mxu0 0.0
    %495 = vmatpush1.msra.mxu0 %v306
    %496 = vmatprep.subr.mxu0 0.0
    %497 = vmatpush1.msra.mxu0 %v307
    %498 = vmatprep.subr.mxu0 0.0
    %499 = vmatpush1.msra.mxu0 %v308
    %500 = vmatprep.subr.mxu0 0.0
    %501 = vmatpush1.msra.mxu0 %v309
    %502 = vmatprep.subr.mxu0 0.0
    %503 = vmatpush1.msra.mxu0 %v310
    %504 = vmatprep.subr.mxu0 0.0
    %505 = vmatpush1.msra.mxu0 %v311
    %506 = vmatprep.subr.mxu0 0.0
    %507 = vmatpush1.msra.mxu0 %v312
    %508 = vmatprep.subr.mxu0 0.0
    %509 = vmatpush1.msra.mxu0 %v313
    %510 = vmatprep.subr.mxu0 0.0
    %511 = vmatpush1.msra.mxu0 %v314
    %512 = vmatprep.subr.mxu0 0.0
    %513 = vmatpush1.msra.mxu0 %v315
    %514 = vmatprep.subr.mxu0 0.0
    %515 = vmatpush1.msra.mxu0 %v316
    %516 = vmatprep.subr.mxu0 0.0
    %517 = vmatpush1.msra.mxu0 %v317
    %518 = vmatprep.subr.mxu0 0.0
    %519 = vmatpush1.msra.mxu0 0.0
    %520 = vmatprep.subr.mxu0 0.0
    %521 = vmatpush1.msra.mxu0 0.0
    %522 = vmatprep.subr.mxu0 0.0
    %523 = vmatpush1.msra.mxu0 0.0
    %524 = vmatprep.subr.mxu0 0.0
    %525 = vmatpush1.msra.mxu0 0.0
    %526 = vmatprep.subr.mxu0 0.0
    %527 = vmatpush1.msra.mxu0 0.0
    %528 = vmatprep.subr.mxu0 0.0
    %529 = vmatpush1.msra.mxu0 0.0
    %530 = vmatprep.subr.mxu0 0.0
    %531 = vmatpush1.msra.mxu0 0.0
    %532 = vmatprep.subr.mxu0 0.0
    %533 = vmatpush1.msra.mxu0 0.0
    %534 = vmatprep.subr.mxu0 0.0
    %535 = vmatpush1.msra.mxu0 0.0
    %536 = vmatprep.subr.mxu0 0.0
    %537 = vmatpush1.msra.mxu0 0.0
    %538 = vmatprep.subr.mxu0 0.0
    %539 = vmatpush1.msra.mxu0 0.0
    %540 = vmatprep.subr.mxu0 0.0
    %541 = vmatpush1.msra.mxu0 0.0
    %542 = vmatprep.subr.mxu0 0.0
    %543 = vmatpush1.msra.mxu0 0.0
    %544 = vmatprep.subr.mxu0 0.0
    %545 = vmatpush1.msra.mxu0 0.0
    %546 = vmatprep.subr.mxu0 0.0
    %547 = vmatpush1.msra.mxu0 0.0
    %548 = vmatprep.subr.mxu0 0.0
    %549 = vmatpush1.msra.mxu0 0.0
    %550 = vmatprep.mubr.f32.mxu0 0.0
    %551 = vmatmul.mubr.f32.gmra.mrb[0].mxu0 %v472
    %v552 = vpop.f32.mrb[0].mxu0
    %v553 = vadd.f32 0.0, %v552
    %v554 = vpop.f32.mrb[0].mxu0
    %555 = vdwg.mxu0
    %556 = vmatprep.subr.mxu0 0.0
    %557 = vmatpush1.msra.mxu0 %v302
    %558 = vmatprep.subr.mxu0 0.0
    %559 = vmatpush1.msra.mxu0 %v303
    %560 = vmatprep.subr.mxu0 0.0
    %561 = vmatpush1.msra.mxu0 %v304
    %562 = vmatprep.subr.mxu0 0.0
    %563 = vmatpush1.msra.mxu0 %v305
    %564 = vmatprep.subr.mxu0 0.0
    %565 = vmatpush1.msra.mxu0 %v306
    %566 = vmatprep.subr.mxu0 0.0
    %567 = vmatpush1.msra.mxu0 %v307
    %568 = vmatprep.subr.mxu0 0.0
    %569 = vmatpush1.msra.mxu0 %v308
    %570 = vmatprep.subr.mxu0 0.0
    %571 = vmatpush1.msra.mxu0 %v309
    %572 = vmatprep.subr.mxu0 0.0
    %573 = vmatpush1.msra.mxu0 %v310
    %574 = vmatprep.subr.mxu0 0.0
    %575 = vmatpush1.msra.mxu0 %v311
    %576 = vmatprep.subr.mxu0 0.0
    %577 = vmatpush1.msra.mxu0 %v312
    %578 = vmatprep.subr.mxu0 0.0
    %579 = vmatpush1.msra.mxu0 %v313
    %580 = vmatprep.subr.mxu0 0.0
    %581 = vmatpush1.msra.mxu0 %v314
    %582 = vmatprep.subr.mxu0 0.0
    %583 = vmatpush1.msra.mxu0 %v315
    %584 = vmatprep.subr.mxu0 0.0
    %585 = vmatpush1.msra.mxu0 %v316
    %586 = vmatprep.subr.mxu0 0.0
    %587 = vmatpush1.msra.mxu0 %v317
    %588 = vmatprep.subr.mxu0 0.0
    %589 = vmatpush1.msra.mxu0 0.0
    %590 = vmatprep.subr.mxu0 0.0
    %591 = vmatpush1.msra.mxu0 0.0
    %592 = vmatprep.subr.mxu0 0.0
    %593 = vmatpush1.msra.mxu0 0.0
    %594 = vmatprep.subr.mxu0 0.0
    %595 = vmatpush1.msra.mxu0 0.0
    %596 = vmatprep.subr.mxu0 0.0
    %597 = vmatpush1.msra.mxu0 0.0
    %598 = vmatprep.subr.mxu0 0.0
    %599 = vmatpush1.msra.mxu0 0.0
    %600 = vmatprep.subr.mxu0 0.0
    %601 = vmatpush1.msra.mxu0 0.0
    %602 = vmatprep.subr.mxu0 0.0
    %603 = vmatpush1.msra.mxu0 0.0
    %604 = vmatprep.subr.mxu0 0.0
    %605 = vmatpush1.msra.mxu0 0.0
    %606 = vmatprep.subr.mxu0 0.0
    %607 = vmatpush1.msra.mxu0 0.0
    %608 = vmatprep.subr.mxu0 0.0
    %609 = vmatpush1.msra.mxu0 0.0
    %610 = vmatprep.subr.mxu0 0.0
    %611 = vmatpush1.msra.mxu0 0.0
    %612 = vmatprep.subr.mxu0 0.0
    %613 = vmatpush1.msra.mxu0 0.0
    %614 = vmatprep.subr.mxu0 0.0
    %615 = vmatpush1.msra.mxu0 0.0
    %616 = vmatprep.subr.mxu0 0.0
    %617 = vmatpush1.msra.mxu0 0.0
    %618 = vmatprep.subr.mxu0 0.0
    %619 = vmatpush1.msra.mxu0 0.0
    %620 = vmatprep.mubr.f32.mxu0 0.0
    %621 = vmatmul.mubr.f32.gmra.mrb[0].mxu0 %v485
    %v622 = vpop.f32.mrb[0].mxu0
    %v623 = vadd.f32 0.0, %v622
    %v624 = vpop.f32.mrb[0].mxu0
    %625 = vdwg.mxu0
    %v626 = vmul.f32 %v553, 0.001953125
    %v627 = vmul.f32 %v623, 0.001953125
    %v628 = vmul.f32 %v626, %v626
    %v629 = vsub.f32 %v627, %v628
    %v630 = vadd.f32 %v629, 1e-05
    %v631 = vrsqrt.pop %v630
    %v632 = vmul.f32 %v333, %v631
    %v633 = vmul.f32 %v626, %v632
    %v635 = vrot.slane %v633, 7
    %v637 = vsub.f32 %v333, %v635
    %vm638 = vcmask 64512
    %v640 = vsel %vm638, %v632, 0
    %642 = vmatprep.subr.mxu0 0.0
    %643 = vmatpush1.msra.mxu0 %v332
    %644 = vmatprep.subr.mxu0 0.0
    %645 = vmatpush1.msra.mxu0 0.0
    %646 = vmatprep.subr.mxu0 0.0
    %647 = vmatpush1.msra.mxu0 0.0
    %648 = vmatprep.subr.mxu0 0.0
    %649 = vmatpush1.msra.mxu0 0.0
    %650 = vmatprep.subr.mxu0 0.0
    %651 = vmatpush1.msra.mxu0 0.0
    %652 = vmatprep.subr.mxu0 0.0
    %653 = vmatpush1.msra.mxu0 0.0
    %654 = vmatprep.subr.mxu0 0.0
    %655 = vmatpush1.msra.mxu0 0.0
    %656 = vmatprep.subr.mxu0 0.0
    %657 = vmatpush1.msra.mxu0 0.0
    %658 = vmatprep.subr.mxu0 0.0
    %659 = vmatpush1.msra.mxu0 0.0
    %660 = vmatprep.subr.mxu0 0.0
    %661 = vmatpush1.msra.mxu0 0.0
    %662 = vmatprep.subr.mxu0 0.0
    %663 = vmatpush1.msra.mxu0 0.0
    %664 = vmatprep.subr.mxu0 0.0
    %665 = vmatpush1.msra.mxu0 0.0
    %666 = vmatprep.subr.mxu0 0.0
    %667 = vmatpush1.msra.mxu0 0.0
    %668 = vmatprep.subr.mxu0 0.0
    %669 = vmatpush1.msra.mxu0 0.0
    %670 = vmatprep.subr.mxu0 0.0
    %671 = vmatpush1.msra.mxu0 0.0
    %672 = vmatprep.subr.mxu0 0.0
    %673 = vmatpush1.msra.mxu0 0.0
    %674 = vmatprep.subr.mxu0 0.0
    %675 = vmatpush1.msra.mxu0 0.0
    %676 = vmatprep.subr.mxu0 0.0
    %677 = vmatpush1.msra.mxu0 0.0
    %678 = vmatprep.subr.mxu0 0.0
    %679 = vmatpush1.msra.mxu0 0.0
    %680 = vmatprep.subr.mxu0 0.0
    %681 = vmatpush1.msra.mxu0 0.0
    %682 = vmatprep.subr.mxu0 0.0
    %683 = vmatpush1.msra.mxu0 0.0
    %684 = vmatprep.subr.mxu0 0.0
    %685 = vmatpush1.msra.mxu0 0.0
    %686 = vmatprep.subr.mxu0 0.0
    %687 = vmatpush1.msra.mxu0 0.0
    %688 = vmatprep.subr.mxu0 0.0
    %689 = vmatpush1.msra.mxu0 0.0
    %690 = vmatprep.subr.mxu0 0.0
    %691 = vmatpush1.msra.mxu0 0.0
    %692 = vmatprep.subr.mxu0 0.0
    %693 = vmatpush1.msra.mxu0 0.0
    %694 = vmatprep.subr.mxu0 0.0
    %695 = vmatpush1.msra.mxu0 0.0
    %696 = vmatprep.subr.mxu0 0.0
    %697 = vmatpush1.msra.mxu0 0.0
    %698 = vmatprep.subr.mxu0 0.0
    %699 = vmatpush1.msra.mxu0 0.0
    %700 = vmatprep.subr.mxu0 0.0
    %701 = vmatpush1.msra.mxu0 0.0
    %702 = vmatprep.subr.mxu0 0.0
    %703 = vmatpush1.msra.mxu0 0.0
    %704 = vmatprep.subr.mxu0 0.0
    %705 = vmatpush1.msra.mxu0 0.0
    %706 = vmatprep.mubr.f32.mxu0 0.0
    %707 = vmatmul.mubr.f32.gmra.mrb[0].mxu0 %v640
    %v708 = vpop.f32.mrb[0].mxu0
    %v709 = vadd.f32 0.0, %v708
    %v710 = vpop.f32.mrb[0].mxu0
    %711 = vdwg.mxu0
    %v713 = vrot.slane %v637, 1
    %v714 = vsel %vm638, %v713, 0
    %716 = vmatprep.subr.mxu0 0.0
    %717 = vmatpush1.msra.mxu0 %v332
    %718 = vmatprep.subr.mxu0 0.0
    %719 = vmatpush1.msra.mxu0 0.0
    %720 = vmatprep.subr.mxu0 0.0
    %721 = vmatpush1.msra.mxu0 0.0
    %722 = vmatprep.subr.mxu0 0.0
    %723 = vmatpush1.msra.mxu0 0.0
    %724 = vmatprep.subr.mxu0 0.0
    %725 = vmatpush1.msra.mxu0 0.0
    %726 = vmatprep.subr.mxu0 0.0
    %727 = vmatpush1.msra.mxu0 0.0
    %728 = vmatprep.subr.mxu0 0.0
    %729 = vmatpush1.msra.mxu0 0.0
    %730 = vmatprep.subr.mxu0 0.0
    %731 = vmatpush1.msra.mxu0 0.0
    %732 = vmatprep.subr.mxu0 0.0
    %733 = vmatpush1.msra.mxu0 0.0
    %734 = vmatprep.subr.mxu0 0.0
    %735 = vmatpush1.msra.mxu0 0.0
    %736 = vmatprep.subr.mxu0 0.0
    %737 = vmatpush1.msra.mxu0 0.0
    %738 = vmatprep.subr.mxu0 0.0
    %739 = vmatpush1.msra.mxu0 0.0
    %740 = vmatprep.subr.mxu0 0.0
    %741 = vmatpush1.msra.mxu0 0.0
    %742 = vmatprep.subr.mxu0 0.0
    %743 = vmatpush1.msra.mxu0 0.0
    %744 = vmatprep.subr.mxu0 0.0
    %745 = vmatpush1.msra.mxu0 0.0
    %746 = vmatprep.subr.mxu0 0.0
    %747 = vmatpush1.msra.mxu0 0.0
    %748 = vmatprep.subr.mxu0 0.0
    %749 = vmatpush1.msra.mxu0 0.0
    %750 = vmatprep.subr.mxu0 0.0
    %751 = vmatpush1.msra.mxu0 0.0
    %752 = vmatprep.subr.mxu0 0.0
    %753 = vmatpush1.msra.mxu0 0.0
    %754 = vmatprep.subr.mxu0 0.0
    %755 = vmatpush1.msra.mxu0 0.0
    %756 = vmatprep.subr.mxu0 0.0
    %757 = vmatpush1.msra.mxu0 0.0
    %758 = vmatprep.subr.mxu0 0.0
    %759 = vmatpush1.msra.mxu0 0.0
    %760 = vmatprep.subr.mxu0 0.0
    %761 = vmatpush1.msra.mxu0 0.0
    %762 = vmatprep.subr.mxu0 0.0
    %763 = vmatpush1.msra.mxu0 0.0
    %764 = vmatprep.subr.mxu0 0.0
    %765 = vmatpush1.msra.mxu0 0.0
    %766 = vmatprep.subr.mxu0 0.0
    %767 = vmatpush1.msra.mxu0 0.0
    %768 = vmatprep.subr.mxu0 0.0
    %769 = vmatpush1.msra.mxu0 0.0
    %770 = vmatprep.subr.mxu0 0.0
    %771 = vmatpush1.msra.mxu0 0.0
    %772 = vmatprep.subr.mxu0 0.0
    %773 = vmatpush1.msra.mxu0 0.0
    %774 = vmatprep.subr.mxu0 0.0
    %775 = vmatpush1.msra.mxu0 0.0
    %776 = vmatprep.subr.mxu0 0.0
    %777 = vmatpush1.msra.mxu0 0.0
    %778 = vmatprep.subr.mxu0 0.0
    %779 = vmatpush1.msra.mxu0 0.0
    %780 = vmatprep.mubr.f32.mxu0 0.0
    %781 = vmatmul.mubr.f32.gmra.mrb[0].mxu0 %v714
    %v782 = vpop.f32.mrb[0].mxu0
    %v783 = vadd.f32 0.0, %v782
    %v784 = vpop.f32.mrb[0].mxu0
    %785 = vdwg.mxu0
    %v786 = vlaneseq
    %v787 = vshrl.u32 %v786, 7
    %v788 = vsub.s32 0, %v787
    %v789 = vrot.slane %v709, %v788
    %v790 = vmul.f32 %v446, %v789
    %v791 = vmul.f32 %v451, %v789
    %v792 = vmul.f32 %v456, %v789
    %v793 = vmul.f32 %v461, %v789
    %v794 = vlaneseq
    %v795 = vshrl.u32 %v794, 7
    %v796 = vsub.s32 0, %v795
    %v797 = vrot.slane %v783, %v796
    %v798 = vadd.f32 %v790, %v797
    %v799 = vadd.f32 %v791, %v797
    %v800 = vadd.f32 %v792, %v797
    %v801 = vadd.f32 %v793, %v797
    %v802 = vmax.f32 %v798, 0.0
    %v803 = vmax.f32 %v799, 0.0
    %v804 = vmax.f32 %v800, 0.0
    %v805 = vmax.f32 %v801, 0.0
    %vm806 = vcmp.lt.s32.totalorder %v60, 0
    %v807 = vsub.s32 0, %v60
    %v808 = vsel %vm806, %v807, %v60
    %v809 = vshrl.u32 %v808, 4
    %v810 = vand.u32 %v808, 15
    %v811 = vsub.s32 0, %v810
    %v812 = vsel %vm806, %v811, %v810
    %vm813 = vcmp.lt.s32.totalorder %v61, 0
    %v814 = vsub.s32 0, %v61
    %v815 = vsel %vm813, %v814, %v61
    %v816 = vshrl.u32 %v815, 4
    %v817 = vand.u32 %v815, 15
    %v818 = vsub.s32 0, %v817
    %v819 = vsel %vm813, %v818, %v817
    %vm820 = vcmp.lt.s32.totalorder %v62, 0
    %v821 = vsub.s32 0, %v62
    %v822 = vsel %vm820, %v821, %v62
    %v823 = vshrl.u32 %v822, 4
    %v824 = vand.u32 %v822, 15
    %v825 = vsub.s32 0, %v824
    %v826 = vsel %vm820, %v825, %v824
    %vm827 = vcmp.lt.s32.totalorder %v63, 0
    %v828 = vsub.s32 0, %v63
    %v829 = vsel %vm827, %v828, %v63
    %v830 = vshrl.u32 %v829, 4
    %v831 = vand.u32 %v829, 15
    %v832 = vsub.s32 0, %v831
    %v833 = vsel %vm827, %v832, %v831
    %vm834 = vcmp.ne.s32.totalorder %v812, 0
    %vm835 = vcmp.ne.s32.totalorder %v819, 0
    %vm836 = vcmp.ne.s32.totalorder %v826, 0
    %vm837 = vcmp.ne.s32.totalorder %v833, 0
    %vm838 = vcmp.lt.s32.totalorder %v812, 0
    %vm839 = vcmp.lt.s32.totalorder %v819, 0
    %vm840 = vcmp.lt.s32.totalorder %v826, 0
    %vm841 = vcmp.lt.s32.totalorder %v833, 0
    %vm842 = vmand %vm838, %vm834
    %vm843 = vmand %vm839, %vm835
    %vm844 = vmand %vm840, %vm836
    %vm845 = vmand %vm841, %vm837
    %v846 = vadd.s32 %v812, 16
    %v847 = vadd.s32 %v819, 16
    %v848 = vadd.s32 %v826, 16
    %v849 = vadd.s32 %v833, 16
    %v850 = vsel %vm842, %v846, %v812
    %v851 = vsel %vm843, %v847, %v819
    %v852 = vsel %vm844, %v848, %v826
    %v853 = vsel %vm845, %v849, %v833
    %vm854 = vcmp.eq.s32.totalorder %v850, 0
    %vm855 = vcmp.eq.s32.totalorder %v851, 0
    %vm856 = vcmp.eq.s32.totalorder %v852, 0
    %vm857 = vcmp.eq.s32.totalorder %v853, 0
    %vm862 = vcmask 1040384
    %v863 = vrot.slane %v802, 7
    %v864 = vrot.slane %v803, 7
    %v865 = vsel %vm862, %v863, %v864
    %v866 = vrot.slane %v804, 7
    %v867 = vsel %vm862, %v864, %v866
    %v868 = vrot.slane %v805, 7
    %v869 = vsel %vm862, %v866, %v868
    %v874 = vsel %vm862, 0.0, %v863
    %v875 = vsel %vm854, 0.0, %v874
    %v876 = vsel %vm855, 0.0, %v865
    %v877 = vsel %vm856, 0.0, %v867
    %v878 = vsel %vm857, 0.0, %v869
    %vm879 = vcmp.eq.s32.totalorder %v850, 15
    %vm880 = vcmp.eq.s32.totalorder %v851, 15
    %vm881 = vcmp.eq.s32.totalorder %v852, 15
    %vm882 = vcmp.eq.s32.totalorder %v853, 15
    %vm883 = vcmask 1046528
    %v884 = vrot.slane %v802, 1
    %v885 = vrot.slane %v803, 1
    %v886 = vsel %vm883, %v884, %v885
    %v887 = vrot.slane %v804, 1
    %v888 = vsel %vm883, %v885, %v887
    %v889 = vrot.slane %v805, 1
    %v890 = vsel %vm883, %v887, %v889
    %v895 = vsel %vm883, %v889, 0.0
    %v896 = vsel %vm879, 0.0, %v886
    %v897 = vsel %vm880, 0.0, %v888
    %v898 = vsel %vm881, 0.0, %v890
    %v899 = vsel %vm882, 0.0, %v895
    %v900 = vld [vmem:[#allocation7] sm:$0xff]
    %v901 = vld [vmem:[#allocation7 + $0x8] sm:$0xff]
    %v902 = vld [vmem:[#allocation7 + $0x10] sm:$0xff]
    %v903 = vld [vmem:[#allocation7 + $0x18] sm:$0xff]
    %v904 = vld [vmem:[#allocation7 + $0x20] sm:$0xff]
    %v905 = vld [vmem:[#allocation7 + $0x28] sm:$0xff]
    %v906 = vld [vmem:[#allocation7 + $0x30] sm:$0xff]
    %v907 = vld [vmem:[#allocation7 + $0x38] sm:$0xff]
    %v908 = vld [vmem:[#allocation7 + $0x40] sm:$0xff]
    %v909 = vld [vmem:[#allocation7 + $0x48] sm:$0xff]
    %v910 = vld [vmem:[#allocation7 + $0x50] sm:$0xff]
    %v911 = vld [vmem:[#allocation7 + $0x58] sm:$0xff]
    %v912 = vld [vmem:[#allocation7 + $0x60] sm:$0xff]
    %v913 = vld [vmem:[#allocation7 + $0x68] sm:$0xff]
    %v914 = vld [vmem:[#allocation7 + $0x70] sm:$0xff]
    %v915 = vld [vmem:[#allocation7 + $0x78] sm:$0xff]
    %v916 = vld [vmem:[#allocation7 + $0x80] sm:$0xff]
    %v917 = vld [vmem:[#allocation7 + $0x88] sm:$0xff]
    %v918 = vld [vmem:[#allocation7 + $0x90] sm:$0xff]
    %v919 = vld [vmem:[#allocation7 + $0x98] sm:$0xff]
    %v920 = vld [vmem:[#allocation7 + $0xa0] sm:$0xff]
    %v921 = vld [vmem:[#allocation7 + $0xa8] sm:$0xff]
    %v922 = vld [vmem:[#allocation7 + $0xb0] sm:$0xff]
    %v923 = vld [vmem:[#allocation7 + $0xb8] sm:$0xff]
    %v924 = vld [vmem:[#allocation7 + $0xc0] sm:$0xff]
    %v925 = vld [vmem:[#allocation7 + $0xc8] sm:$0xff]
    %v926 = vld [vmem:[#allocation7 + $0xd0] sm:$0xff]
    %v927 = vld [vmem:[#allocation7 + $0xd8] sm:$0xff]
    %v928 = vld [vmem:[#allocation7 + $0xe0] sm:$0xff]
    %v929 = vld [vmem:[#allocation7 + $0xe8] sm:$0xff]
    %v930 = vld [vmem:[#allocation7 + $0xf0] sm:$0xff]
    %v931 = vld [vmem:[#allocation7 + $0xf8] sm:$0xff]
    %v932 = vld [vmem:[#allocation7 + $0x100] sm:$0xff]
    %v933 = vld [vmem:[#allocation7 + $0x108] sm:$0xff]
    %v934 = vld [vmem:[#allocation7 + $0x110] sm:$0xff]
    %v935 = vld [vmem:[#allocation7 + $0x118] sm:$0xff]
    %v936 = vld [vmem:[#allocation7 + $0x120] sm:$0xff]
    %v937 = vld [vmem:[#allocation7 + $0x128] sm:$0xff]
    %v938 = vld [vmem:[#allocation7 + $0x130] sm:$0xff]
    %v939 = vld [vmem:[#allocation7 + $0x138] sm:$0xff]
    %v940 = vld [vmem:[#allocation7 + $0x140] sm:$0xff]
    %v941 = vld [vmem:[#allocation7 + $0x148] sm:$0xff]
    %v942 = vld [vmem:[#allocation7 + $0x150] sm:$0xff]
    %v943 = vld [vmem:[#allocation7 + $0x158] sm:$0xff]
    %v944 = vld [vmem:[#allocation7 + $0x160] sm:$0xff]
    %v945 = vld [vmem:[#allocation7 + $0x168] sm:$0xff]
    %v946 = vld [vmem:[#allocation7 + $0x170] sm:$0xff]
    %v947 = vld [vmem:[#allocation7 + $0x178] sm:$0xff]
    %948 = vmatprep.subr.mxu0 0.0
    %949 = vmatpush1.msra.mxu0 %v900
    %950 = vmatprep.subr.mxu0 0.0
    %951 = vmatpush1.msra.mxu0 %v901
    %952 = vmatprep.subr.mxu0 0.0
    %953 = vmatpush1.msra.mxu0 %v902
    %954 = vmatprep.subr.mxu0 0.0
    %955 = vmatpush1.msra.mxu0 %v903
    %956 = vmatprep.subr.mxu0 0.0
    %957 = vmatpush1.msra.mxu0 %v904
    %958 = vmatprep.subr.mxu0 0.0
    %959 = vmatpush1.msra.mxu0 %v905
    %960 = vmatprep.subr.mxu0 0.0
    %961 = vmatpush1.msra.mxu0 %v906
    %962 = vmatprep.subr.mxu0 0.0
    %963 = vmatpush1.msra.mxu0 %v907
    %964 = vmatprep.subr.mxu0 0.0
    %965 = vmatpush1.msra.mxu0 %v908
    %966 = vmatprep.subr.mxu0 0.0
    %967 = vmatpush1.msra.mxu0 %v909
    %968 = vmatprep.subr.mxu0 0.0
    %969 = vmatpush1.msra.mxu0 %v910
    %970 = vmatprep.subr.mxu0 0.0
    %971 = vmatpush1.msra.mxu0 %v911
    %972 = vmatprep.subr.mxu0 0.0
    %973 = vmatpush1.msra.mxu0 %v912
    %974 = vmatprep.subr.mxu0 0.0
    %975 = vmatpush1.msra.mxu0 %v913
    %976 = vmatprep.subr.mxu0 0.0
    %977 = vmatpush1.msra.mxu0 %v914
    %978 = vmatprep.subr.mxu0 0.0
    %979 = vmatpush1.msra.mxu0 %v915
    %980 = vmatprep.subr.mxu0 0.0
    %981 = vmatpush1.msra.mxu0 %v916
    %982 = vmatprep.subr.mxu0 0.0
    %983 = vmatpush1.msra.mxu0 %v917
    %984 = vmatprep.subr.mxu0 0.0
    %985 = vmatpush1.msra.mxu0 %v918
    %986 = vmatprep.subr.mxu0 0.0
    %987 = vmatpush1.msra.mxu0 %v919
    %988 = vmatprep.subr.mxu0 0.0
    %989 = vmatpush1.msra.mxu0 %v920
    %990 = vmatprep.subr.mxu0 0.0
    %991 = vmatpush1.msra.mxu0 %v921
    %992 = vmatprep.subr.mxu0 0.0
    %993 = vmatpush1.msra.mxu0 %v922
    %994 = vmatprep.subr.mxu0 0.0
    %995 = vmatpush1.msra.mxu0 %v923
    %996 = vmatprep.subr.mxu0 0.0
    %997 = vmatpush1.msra.mxu0 %v924
    %998 = vmatprep.subr.mxu0 0.0
    %999 = vmatpush1.msra.mxu0 %v925
    %1000 = vmatprep.subr.mxu0 0.0
    %1001 = vmatpush1.msra.mxu0 %v926
    %1002 = vmatprep.subr.mxu0 0.0
    %1003 = vmatpush1.msra.mxu0 %v927
    %1004 = vmatprep.subr.mxu0 0.0
    %1005 = vmatpush1.msra.mxu0 %v928
    %1006 = vmatprep.subr.mxu0 0.0
    %1007 = vmatpush1.msra.mxu0 %v929
    %1008 = vmatprep.subr.mxu0 0.0
    %1009 = vmatpush1.msra.mxu0 %v930
    %1010 = vmatprep.subr.mxu0 0.0
    %1011 = vmatpush1.msra.mxu0 %v931
    %1012 = vmatprep.mubr.f32.mxu0 %v802
    %1013 = vmatmul.mubr.f32.gmra.mrb[0].mxu0 %v875
    %v1014 = vpop.f32.mrb[0].mxu0
    %v1015 = vadd.f32 0.0, %v1014
    %v1016 = vpop.f32.mrb[0].mxu0
    %1017 = vmatprep.mubr.f32.mxu0 %v803
    %1018 = vmatmul.mubr.f32.gmra.mrb[0].mxu0 %v876
    %v1019 = vpop.f32.mrb[0].mxu0
    %v1020 = vadd.f32 0.0, %v1019
    %v1021 = vpop.f32.mrb[0].mxu0
    %1022 = vmatprep.mubr.f32.mxu0 %v804
    %1023 = vmatmul.mubr.f32.gmra.mrb[0].mxu0 %v877
    %v1024 = vpop.f32.mrb[0].mxu0
    %v1025 = vadd.f32 0.0, %v1024
    %v1026 = vpop.f32.mrb[0].mxu0
    %1027 = vmatprep.mubr.f32.mxu0 %v805
    %1028 = vmatmul.mubr.f32.gmra.mrb[0].mxu0 %v878
    %v1029 = vpop.f32.mrb[0].mxu0
    %v1030 = vadd.f32 0.0, %v1029
    %v1031 = vpop.f32.mrb[0].mxu0
    %1032 = vdwg.mxu0
    %1033 = vmatprep.subr.mxu0 0.0
    %1034 = vmatpush1.msra.mxu0 %v932
    %1035 = vmatprep.subr.mxu0 0.0
    %1036 = vmatpush1.msra.mxu0 %v933
    %1037 = vmatprep.subr.mxu0 0.0
    %1038 = vmatpush1.msra.mxu0 %v934
    %1039 = vmatprep.subr.mxu0 0.0
    %1040 = vmatpush1.msra.mxu0 %v935
    %1041 = vmatprep.subr.mxu0 0.0
    %1042 = vmatpush1.msra.mxu0 %v936
    %1043 = vmatprep.subr.mxu0 0.0
    %1044 = vmatpush1.msra.mxu0 %v937
    %1045 = vmatprep.subr.mxu0 0.0
    %1046 = vmatpush1.msra.mxu0 %v938
    %1047 = vmatprep.subr.mxu0 0.0
    %1048 = vmatpush1.msra.mxu0 %v939
    %1049 = vmatprep.subr.mxu0 0.0
    %1050 = vmatpush1.msra.mxu0 %v940
    %1051 = vmatprep.subr.mxu0 0.0
    %1052 = vmatpush1.msra.mxu0 %v941
    %1053 = vmatprep.subr.mxu0 0.0
    %1054 = vmatpush1.msra.mxu0 %v942
    %1055 = vmatprep.subr.mxu0 0.0
    %1056 = vmatpush1.msra.mxu0 %v943
    %1057 = vmatprep.subr.mxu0 0.0
    %1058 = vmatpush1.msra.mxu0 %v944
    %1059 = vmatprep.subr.mxu0 0.0
    %1060 = vmatpush1.msra.mxu0 %v945
    %1061 = vmatprep.subr.mxu0 0.0
    %1062 = vmatpush1.msra.mxu0 %v946
    %1063 = vmatprep.subr.mxu0 0.0
    %1064 = vmatpush1.msra.mxu0 %v947
    %1065 = vmatprep.subr.mxu0 0.0
    %1066 = vmatpush1.msra.mxu0 0.0
    %1067 = vmatprep.subr.mxu0 0.0
    %1068 = vmatpush1.msra.mxu0 0.0
    %1069 = vmatprep.subr.mxu0 0.0
    %1070 = vmatpush1.msra.mxu0 0.0
    %1071 = vmatprep.subr.mxu0 0.0
    %1072 = vmatpush1.msra.mxu0 0.0
    %1073 = vmatprep.subr.mxu0 0.0
    %1074 = vmatpush1.msra.mxu0 0.0
    %1075 = vmatprep.subr.mxu0 0.0
    %1076 = vmatpush1.msra.mxu0 0.0
    %1077 = vmatprep.subr.mxu0 0.0
    %1078 = vmatpush1.msra.mxu0 0.0
    %1079 = vmatprep.subr.mxu0 0.0
    %1080 = vmatpush1.msra.mxu0 0.0
    %1081 = vmatprep.subr.mxu0 0.0
    %1082 = vmatpush1.msra.mxu0 0.0
    %1083 = vmatprep.subr.mxu0 0.0
    %1084 = vmatpush1.msra.mxu0 0.0
    %1085 = vmatprep.subr.mxu0 0.0
    %1086 = vmatpush1.msra.mxu0 0.0
    %1087 = vmatprep.subr.mxu0 0.0
    %1088 = vmatpush1.msra.mxu0 0.0
    %1089 = vmatprep.subr.mxu0 0.0
    %1090 = vmatpush1.msra.mxu0 0.0
    %1091 = vmatprep.subr.mxu0 0.0
    %1092 = vmatpush1.msra.mxu0 0.0
    %1093 = vmatprep.subr.mxu0 0.0
    %1094 = vmatpush1.msra.mxu0 0.0
    %1095 = vmatprep.subr.mxu0 0.0
    %1096 = vmatpush1.msra.mxu0 0.0
    %1097 = vmatprep.mubr.f32.mxu0 0.0
    %1098 = vmatmul.mubr.f32.gmra.mrb[0].mxu0 %v896
    %v1099 = vpop.f32.mrb[0].mxu0
    %v1100 = vadd.f32 %v1015, %v1099
    %v1101 = vpop.f32.mrb[0].mxu0
    %1102 = vmatprep.mubr.f32.mxu0 0.0
    %1103 = vmatmul.mubr.f32.gmra.mrb[0].mxu0 %v897
    %v1104 = vpop.f32.mrb[0].mxu0
    %v1105 = vadd.f32 %v1020, %v1104
    %v1106 = vpop.f32.mrb[0].mxu0
    %1107 = vmatprep.mubr.f32.mxu0 0.0
    %1108 = vmatmul.mubr.f32.gmra.mrb[0].mxu0 %v898
    %v1109 = vpop.f32.mrb[0].mxu0
    %v1110 = vadd.f32 %v1025, %v1109
    %v1111 = vpop.f32.mrb[0].mxu0
    %1112 = vmatprep.mubr.f32.mxu0 0.0
    %1113 = vmatmul.mubr.f32.gmra.mrb[0].mxu0 %v899
    %v1114 = vpop.f32.mrb[0].mxu0
    %v1115 = vadd.f32 %v1030, %v1114
    %v1116 = vpop.f32.mrb[0].mxu0
    %1117 = vdwg.mxu0
    %v1118 = vadd.f32 %v1100, %v1105
    %v1119 = vadd.f32 %v1118, %v1110
    %v1120 = vadd.f32 %v1119, %v1115
    %v1121 = vrot.slane %v1120, 4
    %v1122 = vadd.f32 %v1120, %v1121
    %v1123 = vrot.slane %v1122, 2
    %v1124 = vadd.f32 %v1122, %v1123
    %v1125 = vrot.slane %v1124, 1
    %v1126 = vadd.f32 %v1124, %v1125
    %v1127 = vmul.f32 %v1100, %v1100
    %v1128 = vmul.f32 %v1105, %v1105
    %v1129 = vmul.f32 %v1110, %v1110
    %v1130 = vmul.f32 %v1115, %v1115
    %v1131 = vadd.f32 %v1127, %v1128
    %v1132 = vadd.f32 %v1131, %v1129
    %v1133 = vadd.f32 %v1132, %v1130
    %v1134 = vrot.slane %v1133, 4
    %v1135 = vadd.f32 %v1133, %v1134
    %v1136 = vrot.slane %v1135, 2
    %v1137 = vadd.f32 %v1135, %v1136
    %v1138 = vrot.slane %v1137, 1
    %v1139 = vadd.f32 %v1137, %v1138
    %1140 = vmatprep.subr.mxu0 0.0
    %1141 = vmatpush1.msra.mxu0 %v302
    %1142 = vmatprep.subr.mxu0 0.0
    %1143 = vmatpush1.msra.mxu0 %v303
    %1144 = vmatprep.subr.mxu0 0.0
    %1145 = vmatpush1.msra.mxu0 %v304
    %1146 = vmatprep.subr.mxu0 0.0
    %1147 = vmatpush1.msra.mxu0 %v305
    %1148 = vmatprep.subr.mxu0 0.0
    %1149 = vmatpush1.msra.mxu0 %v306
    %1150 = vmatprep.subr.mxu0 0.0
    %1151 = vmatpush1.msra.mxu0 %v307
    %1152 = vmatprep.subr.mxu0 0.0
    %1153 = vmatpush1.msra.mxu0 %v308
    %1154 = vmatprep.subr.mxu0 0.0
    %1155 = vmatpush1.msra.mxu0 %v309
    %1156 = vmatprep.subr.mxu0 0.0
    %1157 = vmatpush1.msra.mxu0 %v310
    %1158 = vmatprep.subr.mxu0 0.0
    %1159 = vmatpush1.msra.mxu0 %v311
    %1160 = vmatprep.subr.mxu0 0.0
    %1161 = vmatpush1.msra.mxu0 %v312
    %1162 = vmatprep.subr.mxu0 0.0
    %1163 = vmatpush1.msra.mxu0 %v313
    %1164 = vmatprep.subr.mxu0 0.0
    %1165 = vmatpush1.msra.mxu0 %v314
    %1166 = vmatprep.subr.mxu0 0.0
    %1167 = vmatpush1.msra.mxu0 %v315
    %1168 = vmatprep.subr.mxu0 0.0
    %1169 = vmatpush1.msra.mxu0 %v316
    %1170 = vmatprep.subr.mxu0 0.0
    %1171 = vmatpush1.msra.mxu0 %v317
    %1172 = vmatprep.subr.mxu0 0.0
    %1173 = vmatpush1.msra.mxu0 0.0
    %1174 = vmatprep.subr.mxu0 0.0
    %1175 = vmatpush1.msra.mxu0 0.0
    %1176 = vmatprep.subr.mxu0 0.0
    %1177 = vmatpush1.msra.mxu0 0.0
    %1178 = vmatprep.subr.mxu0 0.0
    %1179 = vmatpush1.msra.mxu0 0.0
    %1180 = vmatprep.subr.mxu0 0.0
    %1181 = vmatpush1.msra.mxu0 0.0
    %1182 = vmatprep.subr.mxu0 0.0
    %1183 = vmatpush1.msra.mxu0 0.0
    %1184 = vmatprep.subr.mxu0 0.0
    %1185 = vmatpush1.msra.mxu0 0.0
    %1186 = vmatprep.subr.mxu0 0.0
    %1187 = vmatpush1.msra.mxu0 0.0
    %1188 = vmatprep.subr.mxu0 0.0
    %1189 = vmatpush1.msra.mxu0 0.0
    %1190 = vmatprep.subr.mxu0 0.0
    %1191 = vmatpush1.msra.mxu0 0.0
    %1192 = vmatprep.subr.mxu0 0.0
    %1193 = vmatpush1.msra.mxu0 0.0
    %1194 = vmatprep.subr.mxu0 0.0
    %1195 = vmatpush1.msra.mxu0 0.0
    %1196 = vmatprep.subr.mxu0 0.0
    %1197 = vmatpush1.msra.mxu0 0.0
    %1198 = vmatprep.subr.mxu0 0.0
    %1199 = vmatpush1.msra.mxu0 0.0
    %1200 = vmatprep.subr.mxu0 0.0
    %1201 = vmatpush1.msra.mxu0 0.0
    %1202 = vmatprep.subr.mxu0 0.0
    %1203 = vmatpush1.msra.mxu0 0.0
    %1204 = vmatprep.mubr.f32.mxu0 0.0
    %1205 = vmatmul.mubr.f32.gmra.mrb[0].mxu0 %v1126
    %v1206 = vpop.f32.mrb[0].mxu0
    %v1207 = vadd.f32 0.0, %v1206
    %v1208 = vpop.f32.mrb[0].mxu0
    %1209 = vdwg.mxu0
    %1210 = vmatprep.subr.mxu0 0.0
    %1211 = vmatpush1.msra.mxu0 %v302
    %1212 = vmatprep.subr.mxu0 0.0
    %1213 = vmatpush1.msra.mxu0 %v303
    %1214 = vmatprep.subr.mxu0 0.0
    %1215 = vmatpush1.msra.mxu0 %v304
    %1216 = vmatprep.subr.mxu0 0.0
    %1217 = vmatpush1.msra.mxu0 %v305
    %1218 = vmatprep.subr.mxu0 0.0
    %1219 = vmatpush1.msra.mxu0 %v306
    %1220 = vmatprep.subr.mxu0 0.0
    %1221 = vmatpush1.msra.mxu0 %v307
    %1222 = vmatprep.subr.mxu0 0.0
    %1223 = vmatpush1.msra.mxu0 %v308
    %1224 = vmatprep.subr.mxu0 0.0
    %1225 = vmatpush1.msra.mxu0 %v309
    %1226 = vmatprep.subr.mxu0 0.0
    %1227 = vmatpush1.msra.mxu0 %v310
    %1228 = vmatprep.subr.mxu0 0.0
    %1229 = vmatpush1.msra.mxu0 %v311
    %1230 = vmatprep.subr.mxu0 0.0
    %1231 = vmatpush1.msra.mxu0 %v312
    %1232 = vmatprep.subr.mxu0 0.0
    %1233 = vmatpush1.msra.mxu0 %v313
    %1234 = vmatprep.subr.mxu0 0.0
    %1235 = vmatpush1.msra.mxu0 %v314
    %1236 = vmatprep.subr.mxu0 0.0
    %1237 = vmatpush1.msra.mxu0 %v315
    %1238 = vmatprep.subr.mxu0 0.0
    %1239 = vmatpush1.msra.mxu0 %v316
    %1240 = vmatprep.subr.mxu0 0.0
    %1241 = vmatpush1.msra.mxu0 %v317
    %1242 = vmatprep.subr.mxu0 0.0
    %1243 = vmatpush1.msra.mxu0 0.0
    %1244 = vmatprep.subr.mxu0 0.0
    %1245 = vmatpush1.msra.mxu0 0.0
    %1246 = vmatprep.subr.mxu0 0.0
    %1247 = vmatpush1.msra.mxu0 0.0
    %1248 = vmatprep.subr.mxu0 0.0
    %1249 = vmatpush1.msra.mxu0 0.0
    %1250 = vmatprep.subr.mxu0 0.0
    %1251 = vmatpush1.msra.mxu0 0.0
    %1252 = vmatprep.subr.mxu0 0.0
    %1253 = vmatpush1.msra.mxu0 0.0
    %1254 = vmatprep.subr.mxu0 0.0
    %1255 = vmatpush1.msra.mxu0 0.0
    %1256 = vmatprep.subr.mxu0 0.0
    %1257 = vmatpush1.msra.mxu0 0.0
    %1258 = vmatprep.subr.mxu0 0.0
    %1259 = vmatpush1.msra.mxu0 0.0
    %1260 = vmatprep.subr.mxu0 0.0
    %1261 = vmatpush1.msra.mxu0 0.0
    %1262 = vmatprep.subr.mxu0 0.0
    %1263 = vmatpush1.msra.mxu0 0.0
    %1264 = vmatprep.subr.mxu0 0.0
    %1265 = vmatpush1.msra.mxu0 0.0
    %1266 = vmatprep.subr.mxu0 0.0
    %1267 = vmatpush1.msra.mxu0 0.0
    %1268 = vmatprep.subr.mxu0 0.0
    %1269 = vmatpush1.msra.mxu0 0.0
    %1270 = vmatprep.subr.mxu0 0.0
    %1271 = vmatpush1.msra.mxu0 0.0
    %1272 = vmatprep.subr.mxu0 0.0
    %1273 = vmatpush1.msra.mxu0 0.0
    %1274 = vmatprep.mubr.f32.mxu0 0.0
    %1275 = vmatmul.mubr.f32.gmra.mrb[0].mxu0 %v1139
    %v1276 = vpop.f32.mrb[0].mxu0
    %v1277 = vadd.f32 0.0, %v1276
    %v1278 = vpop.f32.mrb[0].mxu0
    %1279 = vdwg.mxu0
    %v1280 = vmul.f32 %v1207, 0.001953125
    %v1281 = vmul.f32 %v1277, 0.001953125
    %v1282 = vmul.f32 %v1280, %v1280
    %v1283 = vsub.f32 %v1281, %v1282
    %v1284 = vadd.f32 %v1283, 1e-05
    %v1285 = vrsqrt.pop %v1284
    %v1287 = vrot.slane %v1285, 6
    %v1289 = vmul.f32 %v333, %v1287
    %v1291 = vrot.slane %v1289, 2
    %v1293 = vmul.f32 %v1280, %v1291
    %v1295 = vrot.slane %v1293, 5
    %v1297 = vsub.f32 %v333, %v1295
    %v1298 = vsel %vm638, %v1291, 0
    %1300 = vmatprep.subr.mxu0 0.0
    %1301 = vmatpush1.msra.mxu0 %v332
    %1302 = vmatprep.subr.mxu0 0.0
    %1303 = vmatpush1.msra.mxu0 0.0
    %1304 = vmatprep.subr.mxu0 0.0
    %1305 = vmatpush1.msra.mxu0 0.0
    %1306 = vmatprep.subr.mxu0 0.0
    %1307 = vmatpush1.msra.mxu0 0.0
    %1308 = vmatprep.subr.mxu0 0.0
    %1309 = vmatpush1.msra.mxu0 0.0
    %1310 = vmatprep.subr.mxu0 0.0
    %1311 = vmatpush1.msra.mxu0 0.0
    %1312 = vmatprep.subr.mxu0 0.0
    %1313 = vmatpush1.msra.mxu0 0.0
    %1314 = vmatprep.subr.mxu0 0.0
    %1315 = vmatpush1.msra.mxu0 0.0
    %1316 = vmatprep.subr.mxu0 0.0
    %1317 = vmatpush1.msra.mxu0 0.0
    %1318 = vmatprep.subr.mxu0 0.0
    %1319 = vmatpush1.msra.mxu0 0.0
    %1320 = vmatprep.subr.mxu0 0.0
    %1321 = vmatpush1.msra.mxu0 0.0
    %1322 = vmatprep.subr.mxu0 0.0
    %1323 = vmatpush1.msra.mxu0 0.0
    %1324 = vmatprep.subr.mxu0 0.0
    %1325 = vmatpush1.msra.mxu0 0.0
    %1326 = vmatprep.subr.mxu0 0.0
    %1327 = vmatpush1.msra.mxu0 0.0
    %1328 = vmatprep.subr.mxu0 0.0
    %1329 = vmatpush1.msra.mxu0 0.0
    %1330 = vmatprep.subr.mxu0 0.0
    %1331 = vmatpush1.msra.mxu0 0.0
    %1332 = vmatprep.subr.mxu0 0.0
    %1333 = vmatpush1.msra.mxu0 0.0
    %1334 = vmatprep.subr.mxu0 0.0
    %1335 = vmatpush1.msra.mxu0 0.0
    %1336 = vmatprep.subr.mxu0 0.0
    %1337 = vmatpush1.msra.mxu0 0.0
    %1338 = vmatprep.subr.mxu0 0.0
    %1339 = vmatpush1.msra.mxu0 0.0
    %1340 = vmatprep.subr.mxu0 0.0
    %1341 = vmatpush1.msra.mxu0 0.0
    %1342 = vmatprep.subr.mxu0 0.0
    %1343 = vmatpush1.msra.mxu0 0.0
    %1344 = vmatprep.subr.mxu0 0.0
    %1345 = vmatpush1.msra.mxu0 0.0
    %1346 = vmatprep.subr.mxu0 0.0
    %1347 = vmatpush1.msra.mxu0 0.0
    %1348 = vmatprep.subr.mxu0 0.0
    %1349 = vmatpush1.msra.mxu0 0.0
    %1350 = vmatprep.subr.mxu0 0.0
    %1351 = vmatpush1.msra.mxu0 0.0
    %1352 = vmatprep.subr.mxu0 0.0
    %1353 = vmatpush1.msra.mxu0 0.0
    %1354 = vmatprep.subr.mxu0 0.0
    %1355 = vmatpush1.msra.mxu0 0.0
    %1356 = vmatprep.subr.mxu0 0.0
    %1357 = vmatpush1.msra.mxu0 0.0
    %1358 = vmatprep.subr.mxu0 0.0
    %1359 = vmatpush1.msra.mxu0 0.0
    %1360 = vmatprep.subr.mxu0 0.0
    %1361 = vmatpush1.msra.mxu0 0.0
    %1362 = vmatprep.subr.mxu0 0.0
    %1363 = vmatpush1.msra.mxu0 0.0
    %1364 = vmatprep.mubr.f32.mxu0 0.0
    %1365 = vmatmul.mubr.f32.gmra.mrb[0].mxu0 %v1298
    %v1366 = vpop.f32.mrb[0].mxu0
    %v1367 = vadd.f32 0.0, %v1366
    %v1368 = vpop.f32.mrb[0].mxu0
    %1369 = vdwg.mxu0
    %v1371 = vrot.slane %v1297, 3
    %v1372 = vsel %vm638, %v1371, 0
    %1374 = vmatprep.subr.mxu0 0.0
    %1375 = vmatpush1.msra.mxu0 %v332
    %1376 = vmatprep.subr.mxu0 0.0
    %1377 = vmatpush1.msra.mxu0 0.0
    %1378 = vmatprep.subr.mxu0 0.0
    %1379 = vmatpush1.msra.mxu0 0.0
    %1380 = vmatprep.subr.mxu0 0.0
    %1381 = vmatpush1.msra.mxu0 0.0
    %1382 = vmatprep.subr.mxu0 0.0
    %1383 = vmatpush1.msra.mxu0 0.0
    %1384 = vmatprep.subr.mxu0 0.0
    %1385 = vmatpush1.msra.mxu0 0.0
    %1386 = vmatprep.subr.mxu0 0.0
    %1387 = vmatpush1.msra.mxu0 0.0
    %1388 = vmatprep.subr.mxu0 0.0
    %1389 = vmatpush1.msra.mxu0 0.0
    %1390 = vmatprep.subr.mxu0 0.0
    %1391 = vmatpush1.msra.mxu0 0.0
    %1392 = vmatprep.subr.mxu0 0.0
    %1393 = vmatpush1.msra.mxu0 0.0
    %1394 = vmatprep.subr.mxu0 0.0
    %1395 = vmatpush1.msra.mxu0 0.0
    %1396 = vmatprep.subr.mxu0 0.0
    %1397 = vmatpush1.msra.mxu0 0.0
    %1398 = vmatprep.subr.mxu0 0.0
    %1399 = vmatpush1.msra.mxu0 0.0
    %1400 = vmatprep.subr.mxu0 0.0
    %1401 = vmatpush1.msra.mxu0 0.0
    %1402 = vmatprep.subr.mxu0 0.0
    %1403 = vmatpush1.msra.mxu0 0.0
    %1404 = vmatprep.subr.mxu0 0.0
    %1405 = vmatpush1.msra.mxu0 0.0
    %1406 = vmatprep.subr.mxu0 0.0
    %1407 = vmatpush1.msra.mxu0 0.0
    %1408 = vmatprep.subr.mxu0 0.0
    %1409 = vmatpush1.msra.mxu0 0.0
    %1410 = vmatprep.subr.mxu0 0.0
    %1411 = vmatpush1.msra.mxu0 0.0
    %1412 = vmatprep.subr.mxu0 0.0
    %1413 = vmatpush1.msra.mxu0 0.0
    %1414 = vmatprep.subr.mxu0 0.0
    %1415 = vmatpush1.msra.mxu0 0.0
    %1416 = vmatprep.subr.mxu0 0.0
    %1417 = vmatpush1.msra.mxu0 0.0
    %1418 = vmatprep.subr.mxu0 0.0
    %1419 = vmatpush1.msra.mxu0 0.0
    %1420 = vmatprep.subr.mxu0 0.0
    %1421 = vmatpush1.msra.mxu0 0.0
    %1422 = vmatprep.subr.mxu0 0.0
    %1423 = vmatpush1.msra.mxu0 0.0
    %1424 = vmatprep.subr.mxu0 0.0
    %1425 = vmatpush1.msra.mxu0 0.0
    %1426 = vmatprep.subr.mxu0 0.0
    %1427 = vmatpush1.msra.mxu0 0.0
    %1428 = vmatprep.subr.mxu0 0.0
    %1429 = vmatpush1.msra.mxu0 0.0
    %1430 = vmatprep.subr.mxu0 0.0
    %1431 = vmatpush1.msra.mxu0 0.0
    %1432 = vmatprep.subr.mxu0 0.0
    %1433 = vmatpush1.msra.mxu0 0.0
    %1434 = vmatprep.subr.mxu0 0.0
    %1435 = vmatpush1.msra.mxu0 0.0
    %1436 = vmatprep.subr.mxu0 0.0
    %1437 = vmatpush1.msra.mxu0 0.0
    %1438 = vmatprep.mubr.f32.mxu0 0.0
    %1439 = vmatmul.mubr.f32.gmra.mrb[0].mxu0 %v1372
    %v1440 = vpop.f32.mrb[0].mxu0
    %v1441 = vadd.f32 0.0, %v1440
    %v1442 = vpop.f32.mrb[0].mxu0
    %1443 = vdwg.mxu0
    %v1444 = vlaneseq
    %v1445 = vshrl.u32 %v1444, 7
    %v1446 = vsub.s32 0, %v1445
    %v1447 = vrot.slane %v1367, %v1446
    %v1448 = vmul.f32 %v1100, %v1447
    %v1449 = vmul.f32 %v1105, %v1447
    %v1450 = vmul.f32 %v1110, %v1447
    %v1451 = vmul.f32 %v1115, %v1447
    %v1452 = vlaneseq
    %v1453 = vshrl.u32 %v1452, 7
    %v1454 = vsub.s32 0, %v1453
    %v1455 = vrot.slane %v1441, %v1454
    %v1456 = vadd.f32 %v1448, %v1455
    %v1457 = vadd.f32 %v1449, %v1455
    %v1458 = vadd.f32 %v1450, %v1455
    %v1459 = vadd.f32 %v1451, %v1455
    %v1460 = vmax.f32 %v1456, 0.0
    %v1461 = vmax.f32 %v1457, 0.0
    %v1462 = vmax.f32 %v1458, 0.0
    %v1463 = vmax.f32 %v1459, 0.0
    %1464 = vst [vmem:[#allocation8] sm:$0xff] %v1460
    %1465 = vst [vmem:[#allocation8 + $0x8] sm:$0xff] %v1461
    %1466 = vst [vmem:[#allocation8 + $0x10] sm:$0xff] %v1462
    %1467 = vst [vmem:[#allocation8 + $0x18] sm:$0xff] %v1463
    // Predicated region
    $region30: #{tpu_custom_call.1} parent=1 // pred_check
      _
    $region31: #{tpu_custom_call.1} parent=1 // pred_check_branch
      %1469 = sbr.rel (0) target = $region33
    $region32: #{tpu_custom_call.1} parent=1 // pred_region
      %s1471 = ssub.s32 512, 512
      %1472 = vsyncadd [#allocation4], %s1471
      %s1473 = sshll.u32 [#allocation8], 4
      %s1474 = int_to_ptr.vmem [resolvable:$true] %s1473
      %1479 = dma.vmem_to_hbm [thread:$0]  %s1474, 512, %s4, [#allocation4], 128, 128, 8
    $region33: #{tpu_custom_call.1} parent=1 // pred_fallthru
      _
    // Predicated region
    $region34: #{tpu_custom_call.1} parent=1 // pred_check
      _
    $region35: #{tpu_custom_call.1} parent=1 // pred_check_branch
      %1481 = sbr.rel (0) target = $region37
    $region36: #{tpu_custom_call.1} parent=1 // pred_region
      %1482 = dma.done [#allocation4], 512
    $region37: #{tpu_custom_call.1} parent=1 // pred_fallthru
      _
    %1483 = vsyncpa [#allocation3], 1
    %1484 = vsyncpa [#allocation6], 1
    %1485 = vsyncpa [#allocation4], 1

</llo_original>
